<compile_context>
chip_gen: v7x
topology: tpu7x:2x2x1
jax: 0.10.0
libtpu: 0.0.40
codegen_flags: <defaults>
</compile_context>

<pallas_src>
import functools
import math

import jax
import jax.numpy as jnp
from jax.experimental import pallas as pl
from jax.experimental.pallas import tpu as pltpu


# ----------------------------------------------------------------------------
# Helpers
# ----------------------------------------------------------------------------
def _pick_row_tile(total, target):
    """Largest multiple of 8 that divides `total` and is <= target; else `total`."""
    best = None
    t = 8
    while t <= min(target, total):
        if total % t == 0:
            best = t
        t += 8
    return best if best is not None else total


def _block_diag(blocks):
    """blocks: (M, r, c) -> block-diagonal matrix of shape (M*r, M*c)."""
    M, r, c = blocks.shape
    eye = jnp.eye(M, dtype=blocks.dtype)
    out = eye[:, None, :, None] * blocks[:, :, None, :]      # (M, r, M, c)
    return out.reshape(M * r, M * c)


def prepare_pq_head_params(w1, b1, w2, b2, codebooks, *, matmul_dtype=jnp.bfloat16):
    """Pre-expand per-subvector parameters once (inference-time constants).

    w1: [D, H], b1: [H], w2: [H, D], b2: [D]  (weights stored [in, out], i.e.
    transposed vs torch.nn.Linear).  codebooks: [M, K, D].
    """
    M, K, D = codebooks.shape
    H = w1.shape[1]
    eye = jnp.eye(M, dtype=jnp.float32)
    w1_bd = jnp.kron(eye, w1.astype(jnp.float32)).astype(matmul_dtype)   # (M*D, M*H)
    w2_bd = jnp.kron(eye, w2.astype(jnp.float32)).astype(matmul_dtype)   # (M*H, M*D)
    b1_bd = jnp.tile(b1.astype(jnp.float32), M).reshape(1, M * H)
    b2_bd = jnp.tile(b2.astype(jnp.float32), M).reshape(1, M * D)
    cb_f32 = codebooks.astype(jnp.float32)
    # scoring matrix: block m (rows m*D:(m+1)*D, cols m*K:(m+1)*K) = codebooks[m].T
    cb_score_bd = _block_diag(jnp.transpose(cb_f32, (0, 2, 1))).astype(matmul_dtype)  # (M*D, M*K)
    # gather matrix: block m = codebooks[m]  (kept f32 so codewords stay exact)
    cb_gather_bd = _block_diag(cb_f32)                                                 # (M*K, M*D)
    dims = (M, K, D, H)
    return (w1_bd, b1_bd, w2_bd, b2_bd, cb_score_bd, cb_gather_bd, dims)


# ----------------------------------------------------------------------------
# Fused kernel: enhance + score + argmax + hard codeword gather
# ----------------------------------------------------------------------------
def _pq_head_fused_kernel(x_ref, w1_ref, b1_ref, w2_ref, b2_ref, cbs_ref, cbg_ref,
                          *out_refs, num_subvectors, code_size, emit_enhanced):
    if emit_enhanced:
        o_ref, enh_ref = out_refs
    else:
        (o_ref,) = out_refs

    mdt = w1_ref.dtype                                    # matmul operand dtype (bf16)
    x = x_ref[...].astype(jnp.float32)                    # (TB, M*D)

    # ---- bias MLP + residual (all VMEM-resident, f32 accumulation) ----
    h = jnp.dot(x.astype(mdt), w1_ref[...], preferred_element_type=jnp.float32)
    h = jnp.maximum(h + b1_ref[...], 0.0)                 # bias-add + ReLU in f32
    y = jnp.dot(h.astype(mdt), w2_ref[...], preferred_element_type=jnp.float32)
    enh = x + y + b2_ref[...]                             # enhanced subvectors, f32

    # ---- codebook scoring: block-diag codebook -> segment m in lanes [m*K,(m+1)*K) ----
    scores = jnp.dot(enh.astype(mdt), cbs_ref[...],
                     preferred_element_type=jnp.float32)  # (TB, M*K)

    # ---- per-subvector argmax -> one-hot (first max index, like torch.argmax) ----
    MK = num_subvectors * code_size
    lane = jax.lax.broadcasted_iota(jnp.int32, scores.shape, 1)
    onehot = jnp.zeros(scores.shape, jnp.float32)
    for m in range(num_subvectors):                       # static unroll over M segments
        lo, hi = m * code_size, (m + 1) * code_size
        in_seg = jnp.logical_and(lane >= lo, lane < hi)
        seg_scores = jnp.where(in_seg, scores, -jnp.inf)
        seg_max = jnp.max(seg_scores, axis=-1, keepdims=True)          # (TB, 1)
        cand = jnp.where(seg_scores == seg_max, lane, MK)
        seg_idx = jnp.min(cand, axis=-1, keepdims=True)                # first max index
        onehot = onehot + (lane == seg_idx).astype(jnp.float32)

    # ---- hard codeword gather as an exact f32 one-hot matmul ----
    quant = jnp.dot(onehot, cbg_ref[...], preferred_element_type=jnp.float32)  # (TB, M*D)

    o_ref[...] = quant.astype(o_ref.dtype)                # lane-dense (M*D)-wide store
    if emit_enhanced:
        enh_ref[...] = enh.astype(enh_ref.dtype)


def pq_head_forward(x, prepared, *, tile_rows=1024, return_enhanced=False):
    """x: [B, input_dim] -> quantized [B, input_dim] (PQHead eval forward).

    `prepared` comes from prepare_pq_head_params (built once at setup time).
    If return_enhanced, also returns the enhanced subvectors [B, input_dim]
    (debug/verification only; the default path never materializes them in HBM).
    """
    w1_bd, b1_bd, w2_bd, b2_bd, cbs_bd, cbg_bd, dims = prepared
    M, K, D, H = dims
    B, in_dim = x.shape
    MD, MH, MK = M * D, M * H, M * K
    assert in_dim == MD, f"input dim {in_dim} != num_subvectors*subvector_dim {MD}"

    tile_b = _pick_row_tile(B, tile_rows)
    grid = (B // tile_b,)

    out_shape = [jax.ShapeDtypeStruct((B, MD), x.dtype)]
    out_specs = [pl.BlockSpec((tile_b, MD), lambda i: (i, 0))]
    if return_enhanced:
        out_shape.append(jax.ShapeDtypeStruct((B, MD), jnp.float32))
        out_specs.append(pl.BlockSpec((tile_b, MD), lambda i: (i, 0)))

    wt_itemsize = jnp.dtype(w1_bd.dtype).itemsize
    flops = (2 * B * MD * MH) * 2 + 2 * B * MD * MK + 2 * B * MK * MD
    bytes_accessed = (B * MD * 4) * (3 if return_enhanced else 2) \
        + (w1_bd.size + w2_bd.size + cbs_bd.size) * wt_itemsize \
        + (b1_bd.size + b2_bd.size + cbg_bd.size) * 4

    kernel = functools.partial(
        _pq_head_fused_kernel,
        num_subvectors=M, code_size=K, emit_enhanced=return_enhanced)

    outs = pl.pallas_call(
        kernel,
        out_shape=tuple(out_shape),
        grid=grid,
        in_specs=[
            pl.BlockSpec((tile_b, MD), lambda i: (i, 0)),   # x row tiles: pipelined
            pl.BlockSpec((MD, MH), lambda i: (0, 0)),       # fc1 weights: resident
            pl.BlockSpec((1, MH), lambda i: (0, 0)),        # fc1 bias
            pl.BlockSpec((MH, MD), lambda i: (0, 0)),       # fc2 weights: resident
            pl.BlockSpec((1, MD), lambda i: (0, 0)),        # fc2 bias
            pl.BlockSpec((MD, MK), lambda i: (0, 0)),       # scoring codebook (bf16)
            pl.BlockSpec((MK, MD), lambda i: (0, 0)),       # gather codebook (f32, exact)
        ],
        out_specs=tuple(out_specs),
        compiler_params=pltpu.CompilerParams(
            dimension_semantics=("parallel",),              # shard batch tiles across TCs (v7x)
            vmem_limit_bytes=32 * 1024 * 1024,
        ),
        cost_estimate=pl.CostEstimate(
            flops=flops, transcendentals=0, bytes_accessed=bytes_accessed),
    )(x, w1_bd, b1_bd, w2_bd, b2_bd, cbs_bd, cbg_bd)

    if return_enhanced:
        return outs
    return outs[0]


# ----------------------------------------------------------------------------
# Demo + correctness checks
# ----------------------------------------------------------------------------
if __name__ == "__main__":
    key = jax.random.PRNGKey(0)
    kx, k1, k2, k3, k4, k5 = jax.random.split(key, 6)

    # Small but representative shapes (input_dim = num_subvectors * subvector_dim).
    B = 16
    num_subvectors = 8          # M
    subvector_dim = 32          # D
    hidden_dim = 64             # attention_hidden_dim in PQHead (LinearBias hidden)
    code_size = 16              # K
    input_dim = num_subvectors * subvector_dim   # 256

    x = jax.random.normal(kx, (B, input_dim), jnp.float32)

    # LinearBias params, stored [in, out] (transposed vs torch Linear).
    bound1 = 1.0 / math.sqrt(subvector_dim)
    w1 = jax.random.uniform(k1, (subvector_dim, hidden_dim), jnp.float32, -bound1, bound1)
    b1 = jax.random.uniform(k2, (hidden_dim,), jnp.float32, -bound1, bound1)
    # PQHead zero-inits fc2; the numeric check uses NONZERO values so the second
    # matmul + bias + residual path is actually exercised (review feedback).
    bound2 = 1.0 / math.sqrt(hidden_dim)
    w2 = jax.random.uniform(k3, (hidden_dim, subvector_dim), jnp.float32, -bound2, bound2)
    b2 = jax.random.uniform(k4, (subvector_dim,), jnp.float32, -bound2, bound2)
    codebooks = 0.01 * jax.random.normal(
        k5, (num_subvectors, code_size, subvector_dim), jnp.float32)

    # Block-diagonal expansion done ONCE at setup time (not per forward call).
    prepared = prepare_pq_head_params(w1, b1, w2, b2, codebooks)

    # Production fused path.  tile_rows=8 only to exercise a multi-step pipelined
    # grid at these tiny shapes; the production default is 1024.
    quantized = pq_head_forward(x, prepared, tile_rows=8)
    quantized = jax.block_until_ready(quantized)
    assert quantized.shape == (B, input_dim)

    # Debug path: also emit the (normally VMEM-only) enhanced subvectors so the
    # codeword choice can be verified like-for-like.
    quant_dbg, enh_flat = pq_head_forward(x, prepared, tile_rows=8, return_enhanced=True)
    quant_dbg = jax.block_until_ready(quant_dbg)
    enh_kernel = enh_flat.reshape(B, num_subvectors, subvector_dim)

    assert jnp.allclose(quantized, quant_dbg, atol=1e-6, rtol=0.0), \
        "fused path and debug path disagree"

    # ---------------- reference checks ----------------
    sub = x.reshape(B, num_subvectors, subvector_dim)

    def _ref_enhance(xs, dt):
        h = jnp.maximum(
            jnp.dot(xs.astype(dt), w1.astype(dt),
                    preferred_element_type=jnp.float32) + b1, 0.0)
        y = jnp.dot(h.astype(dt), w2.astype(dt),
                    preferred_element_type=jnp.float32) + b2
        return xs + y

    # 1) bias-enhance stage (kernel uses bf16 MXU operands with f32 accumulation).
    ref_bf16 = _ref_enhance(sub, jnp.bfloat16)
    assert jnp.allclose(enh_kernel, ref_bf16, atol=2e-3, rtol=2e-3), \
        "enhance mismatch vs bf16 reference"
    ref_f32 = _ref_enhance(sub, jnp.float32)
    assert jnp.allclose(enh_kernel, ref_f32, atol=5e-2, rtol=5e-2), \
        "enhance mismatch vs f32 reference (loose: bf16 MXU operands)"

    # 2) PQ argmax quantization, referenced against the kernel's own enhanced
    #    subvectors with the same bf16-operand scoring so codeword choices are
    #    compared like-for-like; gathered codewords must match exactly (f32).
    scores = jnp.einsum('bmd,mkd->bmk',
                        enh_kernel.astype(jnp.bfloat16),
                        codebooks.astype(jnp.bfloat16),
                        preferred_element_type=jnp.float32)
    idx = jnp.argmax(scores, axis=-1)                                    # (B, M)
    ref_q = codebooks[jnp.arange(num_subvectors)[None, :], idx]          # (B, M, D)
    assert jnp.allclose(quant_dbg, ref_q.reshape(B, input_dim), atol=1e-5), \
        "quantize mismatch"

    print("KERNEL_OK")
</pallas_src>

<mosaic_0001>
module attributes {stable_mosaic.version = 11 : i64} {
  func.func @_pq_head_fused_kernel(%arg0: i32, %arg1: memref<8x256xf32, #tpu.memory_space<vmem>>, %arg2: memref<256x512xbf16, #tpu.memory_space<vmem>>, %arg3: memref<1x512xf32, #tpu.memory_space<vmem>>, %arg4: memref<512x256xbf16, #tpu.memory_space<vmem>>, %arg5: memref<1x256xf32, #tpu.memory_space<vmem>>, %arg6: memref<256x128xbf16, #tpu.memory_space<vmem>>, %arg7: memref<128x256xf32, #tpu.memory_space<vmem>>, %arg8: memref<8x256xf32, #tpu.memory_space<vmem>>) attributes {dimension_semantics = [#tpu.dimension_semantics<parallel>], iteration_bounds = array<i64: 2>, scalar_prefetch = 0 : i64, scratch_operands = 0 : i64, tpu.core_type = #tpu.core_type<tc>, window_params = [{transform_indices = @transform_0, window_bounds = array<i64: 8, 256>}, {pipeline_mode = #tpu.pipeline_mode<synchronous>, transform_indices = @transform_1, window_bounds = array<i64: 256, 512>}, {pipeline_mode = #tpu.pipeline_mode<synchronous>, transform_indices = @transform_2, window_bounds = array<i64: 1, 512>}, {pipeline_mode = #tpu.pipeline_mode<synchronous>, transform_indices = @transform_3, window_bounds = array<i64: 512, 256>}, {pipeline_mode = #tpu.pipeline_mode<synchronous>, transform_indices = @transform_4, window_bounds = array<i64: 1, 256>}, {pipeline_mode = #tpu.pipeline_mode<synchronous>, transform_indices = @transform_5, window_bounds = array<i64: 256, 128>}, {pipeline_mode = #tpu.pipeline_mode<synchronous>, transform_indices = @transform_6, window_bounds = array<i64: 128, 256>}, {transform_indices = @transform_7, window_bounds = array<i64: 8, 256>}]} {
    %c0 = arith.constant 0 : index
    %c0_0 = arith.constant 0 : index
    %0 = vector.load %arg1[%c0, %c0_0] : memref<8x256xf32, #tpu.memory_space<vmem>>, vector<8x256xf32>
    %1 = arith.truncf %0 : vector<8x256xf32> to vector<8x256xbf16>
    %c0_1 = arith.constant 0 : index
    %c0_2 = arith.constant 0 : index
    %2 = vector.load %arg2[%c0_1, %c0_2] : memref<256x512xbf16, #tpu.memory_space<vmem>>, vector<256x512xbf16>
    %cst = arith.constant dense<0.000000e+00> : vector<8x512xf32>
    %3 = tpu.matmul %1, %2, %cst {dimension_numbers = #tpu.dot_dimension_numbers<[1], [0], [0], [1], [0, 0, 1, 1], [], []>} : vector<8x256xbf16>, vector<256x512xbf16>, vector<8x512xf32> -> vector<8x512xf32>
    %c0_3 = arith.constant 0 : index
    %c0_4 = arith.constant 0 : index
    %4 = vector.load %arg3[%c0_3, %c0_4] : memref<1x512xf32, #tpu.memory_space<vmem>>, vector<1x512xf32>
    %5 = vector.broadcast %4 : vector<1x512xf32> to vector<8x512xf32>
    %6 = arith.addf %3, %5 : vector<8x512xf32>
    %cst_5 = arith.constant 0.000000e+00 : f32
    %7 = vector.broadcast %cst_5 : f32 to vector<8x512xf32>
    %8 = arith.maximumf %6, %7 : vector<8x512xf32>
    %9 = arith.truncf %8 : vector<8x512xf32> to vector<8x512xbf16>
    %c0_6 = arith.constant 0 : index
    %c0_7 = arith.constant 0 : index
    %10 = vector.load %arg4[%c0_6, %c0_7] : memref<512x256xbf16, #tpu.memory_space<vmem>>, vector<512x256xbf16>
    %cst_8 = arith.constant dense<0.000000e+00> : vector<8x256xf32>
    %11 = tpu.matmul %9, %10, %cst_8 {dimension_numbers = #tpu.dot_dimension_numbers<[1], [0], [0], [1], [0, 0, 1, 1], [], []>} : vector<8x512xbf16>, vector<512x256xbf16>, vector<8x256xf32> -> vector<8x256xf32>
    %12 = arith.addf %0, %11 : vector<8x256xf32>
    %c0_9 = arith.constant 0 : index
    %c0_10 = arith.constant 0 : index
    %13 = vector.load %arg5[%c0_9, %c0_10] : memref<1x256xf32, #tpu.memory_space<vmem>>, vector<1x256xf32>
    %14 = vector.broadcast %13 : vector<1x256xf32> to vector<8x256xf32>
    %15 = arith.addf %12, %14 : vector<8x256xf32>
    %16 = arith.truncf %15 : vector<8x256xf32> to vector<8x256xbf16>
    %c0_11 = arith.constant 0 : index
    %c0_12 = arith.constant 0 : index
    %17 = vector.load %arg6[%c0_11, %c0_12] : memref<256x128xbf16, #tpu.memory_space<vmem>>, vector<256x128xbf16>
    %cst_13 = arith.constant dense<0.000000e+00> : vector<8x128xf32>
    %18 = tpu.matmul %16, %17, %cst_13 {dimension_numbers = #tpu.dot_dimension_numbers<[1], [0], [0], [1], [0, 0, 1, 1], [], []>} : vector<8x256xbf16>, vector<256x128xbf16>, vector<8x128xf32> -> vector<8x128xf32>
    %19 = tpu.iota {dimensions = array<i32: 1>} : vector<8x128xi32>
    %cst_14 = arith.constant 0.000000e+00 : f32
    %20 = vector.broadcast %cst_14 : f32 to vector<8x128xf32>
    %c0_i32 = arith.constant 0 : i32
    %21 = vector.broadcast %c0_i32 : i32 to vector<8x128xi32>
    %22 = arith.cmpi sge, %19, %21 : vector<8x128xi32>
    %c16_i32 = arith.constant 16 : i32
    %23 = vector.broadcast %c16_i32 : i32 to vector<8x128xi32>
    %24 = arith.cmpi slt, %19, %23 : vector<8x128xi32>
    %25 = arith.andi %22, %24 : vector<8x128xi1>
    %cst_15 = arith.constant 0xFF800000 : f32
    %26 = vector.broadcast %cst_15 : f32 to vector<8x128xf32>
    %27 = arith.select %25, %18, %26 : vector<8x128xi1>, vector<8x128xf32>
    %cst_16 = arith.constant dense<0xFF800000> : vector<8xf32>
    %28 = vector.multi_reduction <maximumf>, %27, %cst_16 [1] : vector<8x128xf32> to vector<8xf32>
    %29 = vector.shape_cast %28 : vector<8xf32> to vector<8x1xf32>
    %30 = vector.broadcast %29 : vector<8x1xf32> to vector<8x128xf32>
    %31 = arith.cmpf oeq, %27, %30 : vector<8x128xf32>
    %c128_i32 = arith.constant 128 : i32
    %32 = vector.broadcast %c128_i32 : i32 to vector<8x128xi32>
    %33 = arith.select %31, %19, %32 : vector<8x128xi1>, vector<8x128xi32>
    %cst_17 = arith.constant dense<2147483647> : vector<8xi32>
    %34 = vector.multi_reduction <minsi>, %33, %cst_17 [1] : vector<8x128xi32> to vector<8xi32>
    %35 = vector.shape_cast %34 : vector<8xi32> to vector<8x1xi32>
    %36 = vector.broadcast %35 : vector<8x1xi32> to vector<8x128xi32>
    %37 = arith.cmpi eq, %19, %36 : vector<8x128xi32>
    %38 = arith.extui %37 : vector<8x128xi1> to vector<8x128xi32>
    %39 = arith.sitofp %38 : vector<8x128xi32> to vector<8x128xf32>
    %40 = arith.addf %20, %39 : vector<8x128xf32>
    %c16_i32_18 = arith.constant 16 : i32
    %41 = vector.broadcast %c16_i32_18 : i32 to vector<8x128xi32>
    %42 = arith.cmpi sge, %19, %41 : vector<8x128xi32>
    %c32_i32 = arith.constant 32 : i32
    %43 = vector.broadcast %c32_i32 : i32 to vector<8x128xi32>
    %44 = arith.cmpi slt, %19, %43 : vector<8x128xi32>
    %45 = arith.andi %42, %44 : vector<8x128xi1>
    %cst_19 = arith.constant 0xFF800000 : f32
    %46 = vector.broadcast %cst_19 : f32 to vector<8x128xf32>
    %47 = arith.select %45, %18, %46 : vector<8x128xi1>, vector<8x128xf32>
    %cst_20 = arith.constant dense<0xFF800000> : vector<8xf32>
    %48 = vector.multi_reduction <maximumf>, %47, %cst_20 [1] : vector<8x128xf32> to vector<8xf32>
    %49 = vector.shape_cast %48 : vector<8xf32> to vector<8x1xf32>
    %50 = vector.broadcast %49 : vector<8x1xf32> to vector<8x128xf32>
    %51 = arith.cmpf oeq, %47, %50 : vector<8x128xf32>
    %c128_i32_21 = arith.constant 128 : i32
    %52 = vector.broadcast %c128_i32_21 : i32 to vector<8x128xi32>
    %53 = arith.select %51, %19, %52 : vector<8x128xi1>, vector<8x128xi32>
    %cst_22 = arith.constant dense<2147483647> : vector<8xi32>
    %54 = vector.multi_reduction <minsi>, %53, %cst_22 [1] : vector<8x128xi32> to vector<8xi32>
    %55 = vector.shape_cast %54 : vector<8xi32> to vector<8x1xi32>
    %56 = vector.broadcast %55 : vector<8x1xi32> to vector<8x128xi32>
    %57 = arith.cmpi eq, %19, %56 : vector<8x128xi32>
    %58 = arith.extui %57 : vector<8x128xi1> to vector<8x128xi32>
    %59 = arith.sitofp %58 : vector<8x128xi32> to vector<8x128xf32>
    %60 = arith.addf %40, %59 : vector<8x128xf32>
    %c32_i32_23 = arith.constant 32 : i32
    %61 = vector.broadcast %c32_i32_23 : i32 to vector<8x128xi32>
    %62 = arith.cmpi sge, %19, %61 : vector<8x128xi32>
    %c48_i32 = arith.constant 48 : i32
    %63 = vector.broadcast %c48_i32 : i32 to vector<8x128xi32>
    %64 = arith.cmpi slt, %19, %63 : vector<8x128xi32>
    %65 = arith.andi %62, %64 : vector<8x128xi1>
    %cst_24 = arith.constant 0xFF800000 : f32
    %66 = vector.broadcast %cst_24 : f32 to vector<8x128xf32>
    %67 = arith.select %65, %18, %66 : vector<8x128xi1>, vector<8x128xf32>
    %cst_25 = arith.constant dense<0xFF800000> : vector<8xf32>
    %68 = vector.multi_reduction <maximumf>, %67, %cst_25 [1] : vector<8x128xf32> to vector<8xf32>
    %69 = vector.shape_cast %68 : vector<8xf32> to vector<8x1xf32>
    %70 = vector.broadcast %69 : vector<8x1xf32> to vector<8x128xf32>
    %71 = arith.cmpf oeq, %67, %70 : vector<8x128xf32>
    %c128_i32_26 = arith.constant 128 : i32
    %72 = vector.broadcast %c128_i32_26 : i32 to vector<8x128xi32>
    %73 = arith.select %71, %19, %72 : vector<8x128xi1>, vector<8x128xi32>
    %cst_27 = arith.constant dense<2147483647> : vector<8xi32>
    %74 = vector.multi_reduction <minsi>, %73, %cst_27 [1] : vector<8x128xi32> to vector<8xi32>
    %75 = vector.shape_cast %74 : vector<8xi32> to vector<8x1xi32>
    %76 = vector.broadcast %75 : vector<8x1xi32> to vector<8x128xi32>
    %77 = arith.cmpi eq, %19, %76 : vector<8x128xi32>
    %78 = arith.extui %77 : vector<8x128xi1> to vector<8x128xi32>
    %79 = arith.sitofp %78 : vector<8x128xi32> to vector<8x128xf32>
    %80 = arith.addf %60, %79 : vector<8x128xf32>
    %c48_i32_28 = arith.constant 48 : i32
    %81 = vector.broadcast %c48_i32_28 : i32 to vector<8x128xi32>
    %82 = arith.cmpi sge, %19, %81 : vector<8x128xi32>
    %c64_i32 = arith.constant 64 : i32
    %83 = vector.broadcast %c64_i32 : i32 to vector<8x128xi32>
    %84 = arith.cmpi slt, %19, %83 : vector<8x128xi32>
    %85 = arith.andi %82, %84 : vector<8x128xi1>
    %cst_29 = arith.constant 0xFF800000 : f32
    %86 = vector.broadcast %cst_29 : f32 to vector<8x128xf32>
    %87 = arith.select %85, %18, %86 : vector<8x128xi1>, vector<8x128xf32>
    %cst_30 = arith.constant dense<0xFF800000> : vector<8xf32>
    %88 = vector.multi_reduction <maximumf>, %87, %cst_30 [1] : vector<8x128xf32> to vector<8xf32>
    %89 = vector.shape_cast %88 : vector<8xf32> to vector<8x1xf32>
    %90 = vector.broadcast %89 : vector<8x1xf32> to vector<8x128xf32>
    %91 = arith.cmpf oeq, %87, %90 : vector<8x128xf32>
    %c128_i32_31 = arith.constant 128 : i32
    %92 = vector.broadcast %c128_i32_31 : i32 to vector<8x128xi32>
    %93 = arith.select %91, %19, %92 : vector<8x128xi1>, vector<8x128xi32>
    %cst_32 = arith.constant dense<2147483647> : vector<8xi32>
    %94 = vector.multi_reduction <minsi>, %93, %cst_32 [1] : vector<8x128xi32> to vector<8xi32>
    %95 = vector.shape_cast %94 : vector<8xi32> to vector<8x1xi32>
    %96 = vector.broadcast %95 : vector<8x1xi32> to vector<8x128xi32>
    %97 = arith.cmpi eq, %19, %96 : vector<8x128xi32>
    %98 = arith.extui %97 : vector<8x128xi1> to vector<8x128xi32>
    %99 = arith.sitofp %98 : vector<8x128xi32> to vector<8x128xf32>
    %100 = arith.addf %80, %99 : vector<8x128xf32>
    %c64_i32_33 = arith.constant 64 : i32
    %101 = vector.broadcast %c64_i32_33 : i32 to vector<8x128xi32>
    %102 = arith.cmpi sge, %19, %101 : vector<8x128xi32>
    %c80_i32 = arith.constant 80 : i32
    %103 = vector.broadcast %c80_i32 : i32 to vector<8x128xi32>
    %104 = arith.cmpi slt, %19, %103 : vector<8x128xi32>
    %105 = arith.andi %102, %104 : vector<8x128xi1>
    %cst_34 = arith.constant 0xFF800000 : f32
    %106 = vector.broadcast %cst_34 : f32 to vector<8x128xf32>
    %107 = arith.select %105, %18, %106 : vector<8x128xi1>, vector<8x128xf32>
    %cst_35 = arith.constant dense<0xFF800000> : vector<8xf32>
    %108 = vector.multi_reduction <maximumf>, %107, %cst_35 [1] : vector<8x128xf32> to vector<8xf32>
    %109 = vector.shape_cast %108 : vector<8xf32> to vector<8x1xf32>
    %110 = vector.broadcast %109 : vector<8x1xf32> to vector<8x128xf32>
    %111 = arith.cmpf oeq, %107, %110 : vector<8x128xf32>
    %c128_i32_36 = arith.constant 128 : i32
    %112 = vector.broadcast %c128_i32_36 : i32 to vector<8x128xi32>
    %113 = arith.select %111, %19, %112 : vector<8x128xi1>, vector<8x128xi32>
    %cst_37 = arith.constant dense<2147483647> : vector<8xi32>
    %114 = vector.multi_reduction <minsi>, %113, %cst_37 [1] : vector<8x128xi32> to vector<8xi32>
    %115 = vector.shape_cast %114 : vector<8xi32> to vector<8x1xi32>
    %116 = vector.broadcast %115 : vector<8x1xi32> to vector<8x128xi32>
    %117 = arith.cmpi eq, %19, %116 : vector<8x128xi32>
    %118 = arith.extui %117 : vector<8x128xi1> to vector<8x128xi32>
    %119 = arith.sitofp %118 : vector<8x128xi32> to vector<8x128xf32>
    %120 = arith.addf %100, %119 : vector<8x128xf32>
    %c80_i32_38 = arith.constant 80 : i32
    %121 = vector.broadcast %c80_i32_38 : i32 to vector<8x128xi32>
    %122 = arith.cmpi sge, %19, %121 : vector<8x128xi32>
    %c96_i32 = arith.constant 96 : i32
    %123 = vector.broadcast %c96_i32 : i32 to vector<8x128xi32>
    %124 = arith.cmpi slt, %19, %123 : vector<8x128xi32>
    %125 = arith.andi %122, %124 : vector<8x128xi1>
    %cst_39 = arith.constant 0xFF800000 : f32
    %126 = vector.broadcast %cst_39 : f32 to vector<8x128xf32>
    %127 = arith.select %125, %18, %126 : vector<8x128xi1>, vector<8x128xf32>
    %cst_40 = arith.constant dense<0xFF800000> : vector<8xf32>
    %128 = vector.multi_reduction <maximumf>, %127, %cst_40 [1] : vector<8x128xf32> to vector<8xf32>
    %129 = vector.shape_cast %128 : vector<8xf32> to vector<8x1xf32>
    %130 = vector.broadcast %129 : vector<8x1xf32> to vector<8x128xf32>
    %131 = arith.cmpf oeq, %127, %130 : vector<8x128xf32>
    %c128_i32_41 = arith.constant 128 : i32
    %132 = vector.broadcast %c128_i32_41 : i32 to vector<8x128xi32>
    %133 = arith.select %131, %19, %132 : vector<8x128xi1>, vector<8x128xi32>
    %cst_42 = arith.constant dense<2147483647> : vector<8xi32>
    %134 = vector.multi_reduction <minsi>, %133, %cst_42 [1] : vector<8x128xi32> to vector<8xi32>
    %135 = vector.shape_cast %134 : vector<8xi32> to vector<8x1xi32>
    %136 = vector.broadcast %135 : vector<8x1xi32> to vector<8x128xi32>
    %137 = arith.cmpi eq, %19, %136 : vector<8x128xi32>
    %138 = arith.extui %137 : vector<8x128xi1> to vector<8x128xi32>
    %139 = arith.sitofp %138 : vector<8x128xi32> to vector<8x128xf32>
    %140 = arith.addf %120, %139 : vector<8x128xf32>
    %c96_i32_43 = arith.constant 96 : i32
    %141 = vector.broadcast %c96_i32_43 : i32 to vector<8x128xi32>
    %142 = arith.cmpi sge, %19, %141 : vector<8x128xi32>
    %c112_i32 = arith.constant 112 : i32
    %143 = vector.broadcast %c112_i32 : i32 to vector<8x128xi32>
    %144 = arith.cmpi slt, %19, %143 : vector<8x128xi32>
    %145 = arith.andi %142, %144 : vector<8x128xi1>
    %cst_44 = arith.constant 0xFF800000 : f32
    %146 = vector.broadcast %cst_44 : f32 to vector<8x128xf32>
    %147 = arith.select %145, %18, %146 : vector<8x128xi1>, vector<8x128xf32>
    %cst_45 = arith.constant dense<0xFF800000> : vector<8xf32>
    %148 = vector.multi_reduction <maximumf>, %147, %cst_45 [1] : vector<8x128xf32> to vector<8xf32>
    %149 = vector.shape_cast %148 : vector<8xf32> to vector<8x1xf32>
    %150 = vector.broadcast %149 : vector<8x1xf32> to vector<8x128xf32>
    %151 = arith.cmpf oeq, %147, %150 : vector<8x128xf32>
    %c128_i32_46 = arith.constant 128 : i32
    %152 = vector.broadcast %c128_i32_46 : i32 to vector<8x128xi32>
    %153 = arith.select %151, %19, %152 : vector<8x128xi1>, vector<8x128xi32>
    %cst_47 = arith.constant dense<2147483647> : vector<8xi32>
    %154 = vector.multi_reduction <minsi>, %153, %cst_47 [1] : vector<8x128xi32> to vector<8xi32>
    %155 = vector.shape_cast %154 : vector<8xi32> to vector<8x1xi32>
    %156 = vector.broadcast %155 : vector<8x1xi32> to vector<8x128xi32>
    %157 = arith.cmpi eq, %19, %156 : vector<8x128xi32>
    %158 = arith.extui %157 : vector<8x128xi1> to vector<8x128xi32>
    %159 = arith.sitofp %158 : vector<8x128xi32> to vector<8x128xf32>
    %160 = arith.addf %140, %159 : vector<8x128xf32>
    %c112_i32_48 = arith.constant 112 : i32
    %161 = vector.broadcast %c112_i32_48 : i32 to vector<8x128xi32>
    %162 = arith.cmpi sge, %19, %161 : vector<8x128xi32>
    %c128_i32_49 = arith.constant 128 : i32
    %163 = vector.broadcast %c128_i32_49 : i32 to vector<8x128xi32>
    %164 = arith.cmpi slt, %19, %163 : vector<8x128xi32>
    %165 = arith.andi %162, %164 : vector<8x128xi1>
    %cst_50 = arith.constant 0xFF800000 : f32
    %166 = vector.broadcast %cst_50 : f32 to vector<8x128xf32>
    %167 = arith.select %165, %18, %166 : vector<8x128xi1>, vector<8x128xf32>
    %cst_51 = arith.constant dense<0xFF800000> : vector<8xf32>
    %168 = vector.multi_reduction <maximumf>, %167, %cst_51 [1] : vector<8x128xf32> to vector<8xf32>
    %169 = vector.shape_cast %168 : vector<8xf32> to vector<8x1xf32>
    %170 = vector.broadcast %169 : vector<8x1xf32> to vector<8x128xf32>
    %171 = arith.cmpf oeq, %167, %170 : vector<8x128xf32>
    %c128_i32_52 = arith.constant 128 : i32
    %172 = vector.broadcast %c128_i32_52 : i32 to vector<8x128xi32>
    %173 = arith.select %171, %19, %172 : vector<8x128xi1>, vector<8x128xi32>
    %cst_53 = arith.constant dense<2147483647> : vector<8xi32>
    %174 = vector.multi_reduction <minsi>, %173, %cst_53 [1] : vector<8x128xi32> to vector<8xi32>
    %175 = vector.shape_cast %174 : vector<8xi32> to vector<8x1xi32>
    %176 = vector.broadcast %175 : vector<8x1xi32> to vector<8x128xi32>
    %177 = arith.cmpi eq, %19, %176 : vector<8x128xi32>
    %178 = arith.extui %177 : vector<8x128xi1> to vector<8x128xi32>
    %179 = arith.sitofp %178 : vector<8x128xi32> to vector<8x128xf32>
    %180 = arith.addf %160, %179 : vector<8x128xf32>
    %c0_54 = arith.constant 0 : index
    %c0_55 = arith.constant 0 : index
    %181 = vector.load %arg7[%c0_54, %c0_55] : memref<128x256xf32, #tpu.memory_space<vmem>>, vector<128x256xf32>
    %cst_56 = arith.constant dense<0.000000e+00> : vector<8x256xf32>
    %182 = tpu.matmul %180, %181, %cst_56 {dimension_numbers = #tpu.dot_dimension_numbers<[1], [0], [0], [1], [0, 0, 1, 1], [], []>} : vector<8x128xf32>, vector<128x256xf32>, vector<8x256xf32> -> vector<8x256xf32>
    %c0_57 = arith.constant 0 : index
    %c0_58 = arith.constant 0 : index
    %183 = vector.load %arg8[%c0_57, %c0_58] : memref<8x256xf32, #tpu.memory_space<vmem>>, vector<8x256xf32>
    tpu.vector_store %arg8[%c0_57, %c0_58], %182 {strides = array<i32>} : memref<8x256xf32, #tpu.memory_space<vmem>>, vector<8x256xf32>,
    return
  }
  func.func @transform_0(%arg0: i32) -> (i32, i32) {
    %c0_i32 = arith.constant 0 : i32
    %c0_i32_0 = arith.constant 0 : i32
    return %arg0, %c0_i32 : i32, i32
  }
  func.func @transform_1(%arg0: i32) -> (i32, i32) {
    %c0_i32 = arith.constant 0 : i32
    %c0_i32_0 = arith.constant 0 : i32
    %c0_i32_1 = arith.constant 0 : i32
    return %c0_i32, %c0_i32_0 : i32, i32
  }
  func.func @transform_2(%arg0: i32) -> (i32, i32) {
    %c0_i32 = arith.constant 0 : i32
    %c0_i32_0 = arith.constant 0 : i32
    %c0_i32_1 = arith.constant 0 : i32
    return %c0_i32, %c0_i32_0 : i32, i32
  }
  func.func @transform_3(%arg0: i32) -> (i32, i32) {
    %c0_i32 = arith.constant 0 : i32
    %c0_i32_0 = arith.constant 0 : i32
    %c0_i32_1 = arith.constant 0 : i32
    return %c0_i32, %c0_i32_0 : i32, i32
  }
  func.func @transform_4(%arg0: i32) -> (i32, i32) {
    %c0_i32 = arith.constant 0 : i32
    %c0_i32_0 = arith.constant 0 : i32
    %c0_i32_1 = arith.constant 0 : i32
    return %c0_i32, %c0_i32_0 : i32, i32
  }
  func.func @transform_5(%arg0: i32) -> (i32, i32) {
    %c0_i32 = arith.constant 0 : i32
    %c0_i32_0 = arith.constant 0 : i32
    %c0_i32_1 = arith.constant 0 : i32
    return %c0_i32, %c0_i32_0 : i32, i32
  }
  func.func @transform_6(%arg0: i32) -> (i32, i32) {
    %c0_i32 = arith.constant 0 : i32
    %c0_i32_0 = arith.constant 0 : i32
    %c0_i32_1 = arith.constant 0 : i32
    return %c0_i32, %c0_i32_0 : i32, i32
  }
  func.func @transform_7(%arg0: i32) -> (i32, i32) {
    %c0_i32 = arith.constant 0 : i32
    %c0_i32_0 = arith.constant 0 : i32
    return %arg0, %c0_i32 : i32, i32
  }
}

</mosaic_0001>

<llo_original>
// kernel: tpu_custom_call.1
$region0: #{tpu_custom_call.1}
  #allocation0 [shape = 'u32[]', space=smem, size = 0x4, offset = 0x4, fixed_abs, tag = 'smem constant byte address 0x4 - core index']
  #allocation1 [shape = 'u32[144,128]{1,0:T(1,128)}', space=vmem, size = 0x12000, scoped, tag = 'internal scratch']
  %s0 = inlined_call_operand.hbm [shape: f32[16,256], index: 0, kind: input, shape index: {}]
  %s1 = inlined_call_operand.hbm [shape: bf16[256,512], index: 1, kind: input, shape index: {}]
  %s2 = inlined_call_operand.vmem [shape: f32[1,512], index: 2, kind: input, shape index: {}]
  %s3 = inlined_call_operand.hbm [shape: bf16[512,256], index: 3, kind: input, shape index: {}]
  %s4 = inlined_call_operand.vmem [shape: f32[1,256], index: 4, kind: input, shape index: {}]
  %s5 = inlined_call_operand.hbm [shape: bf16[256,128], index: 5, kind: input, shape index: {}]
  %s6 = inlined_call_operand.hbm [shape: f32[128,256], index: 6, kind: input, shape index: {}]
  %s7 = inlined_call_operand.hbm [shape: f32[16,256], index: 7, kind: output, shape index: {}]
  %s8 = sld [smem:[#allocation0]]
  $region81: #{tpu_custom_call.1} parent=0
    _
  %s10 = ssub.s32 1, %s8
  %s11 = scalar_select 0, %s10, %s8
  $region1: #{tpu_custom_call.1} parent=0
    #allocation2 [shape = 'u8[16384]{0}', space=vmem, size = 0x4000, scoped, tag = 'input window, operand 0']
    #allocation3 [shape = 's32[2]{0}', space=sflag, size = 0x8, scoped, tag = 'scoped memory for tpu_custom_call.1']
    #allocation4 [shape = 's32[2]{0}', space=sflag, size = 0x8, scoped, tag = 'scoped memory for tpu_custom_call.1']
    #allocation5 [shape = 'u8[262144]{0}', space=vmem, size = 0x40000, scoped, tag = 'input window, operand 1, single buffered']
    #allocation6 [shape = 's32[1]{0}', space=sflag, size = 0x4, scoped, tag = 'scoped memory for tpu_custom_call.1']
    #allocation7 [shape = 'u8[262144]{0}', space=vmem, size = 0x40000, scoped, tag = 'input window, operand 3, single buffered']
    #allocation8 [shape = 'u8[65536]{0}', space=vmem, size = 0x10000, scoped, tag = 'input window, operand 5, single buffered']
    #allocation9 [shape = 's32[1]{0}', space=sflag, size = 0x4, scoped, tag = 'scoped memory for tpu_custom_call.1']
    #allocation10 [shape = 'u8[131072]{0}', space=vmem, size = 0x20000, scoped, tag = 'input window, operand 6, single buffered']
    #allocation11 [shape = 'u8[16384]{0}', space=vmem, size = 0x4000, scoped, tag = 'output window, operand 0']
    %12 = vsyncpa [#allocation3], 0
    %s13 = scalar_lea.sflag [#allocation3], 1
    %14 = vsyncpa %s13, 0
    %15 = vsyncpa [#allocation6], 0
    %16 = vsyncpa [#allocation9], 0
    %17 = vsyncpa [#allocation4], 0
    %s18 = scalar_lea.sflag [#allocation4], 1
    %19 = vsyncpa %s18, 0
    loop: start=0, step=1, limit=4
    $region2: #{tpu_custom_call.1} parent=1 // loop_pre_header
      _
    $region3: #{tpu_custom_call.1} parent=1 // loop_header
      %s21 = sphi 0, %s25
      %p22 = scmp.ge.s32.totalorder %s21, 4
      %s31 = sphi 0, %s33
      %s34 = sphi 0, %s31
      %s35 = sphi 0, %s34
      %s51 = sphi 0, %s35
      %s55 = sphi 0, %s55
      %s57 = sphi 0, %s55
      %s58 = sphi 0, %s57
      %s72 = sphi 0, %s58
      %s76 = sphi 0, %s76
      %s78 = sphi 0, %s76
      %s79 = sphi 0, %s78
      %s93 = sphi 0, %s79
      %s97 = sphi 0, %s97
      %s99 = sphi 0, %s97
      %s100 = sphi 0, %s99
      %s114 = sphi 0, %s100
      %s118 = sphi 0, %s118
      %s120 = sphi 0, %s118
      %s121 = sphi 0, %s120
      %s135 = sphi 0, %s121
      %s139 = sphi 0, %s139
      %s141 = sphi 0, %s139
      %s142 = sphi 0, %s141
      %s156 = sphi 0, %s142
      %s160 = sphi 0, %s160
      %s162 = sphi 0, %s160
      %s163 = sphi 0, %s162
      %s177 = sphi 0, %s163
      %s183 = sphi 0, %s185
      %s186 = sphi 0, %s183
      %s187 = sphi 0, %s186
      %s203 = sphi 0, %s187
    $region4: #{tpu_custom_call.1} parent=1 // loop_header_branch
      %24 = sbr.rel (%p22) target = $region8
    $region5: #{tpu_custom_call.1} parent=1 // loop_body
      %s26 = ssub.s32 %s21, 1
      %s27 = ssub.s32 %s21, 2
      %s28 = sadd.s32 %s21, 1
      %s29 = ssub.s32 %s21, %s28
      %p30 = scmp.eq.s32.totalorder %s29, 0
      %s32 = sadd.s32 %s31, 1
      %s33 = scalar_select %p30, %s31, %s32
      %p36 = pneg %p30
      %p37 = scmp.eq.s32.totalorder %s21, 1
      %p38 = por %p36, %p37
      %p39 = scmp.ne.s32.totalorder %s31, %s34
      %p40 = scmp.eq.s32.totalorder %s21, 0
      %p41 = por %p39, %p40
      %p42 = scmp.ne.s32.totalorder %s31, %s34
      %p43 = scmp.eq.s32.totalorder %s26, 1
      %p44 = por %p42, %p43
      %p45 = scmp.ne.s32.totalorder %s34, %s35
      %p46 = scmp.eq.s32.totalorder %s26, 0
      %p47 = por %p45, %p46
      %p48 = scmp.ne.s32.totalorder %s34, %s35
      %p49 = scmp.eq.s32.totalorder %s27, 1
      %p50 = por %p48, %p49
      %p52 = scmp.ne.s32.totalorder %s35, %s51
      %p53 = scmp.eq.s32.totalorder %s27, 0
      %p54 = por %p52, %p53
      %s56 = sadd.s32 %s55, 1
      %p59 = scmp.eq.s32.totalorder %s21, 1
      %p60 = scmp.ne.s32.totalorder %s55, %s57
      %p61 = scmp.eq.s32.totalorder %s21, 0
      %p62 = por %p60, %p61
      %p63 = scmp.ne.s32.totalorder %s55, %s57
      %p64 = scmp.eq.s32.totalorder %s26, 1
      %p65 = por %p63, %p64
      %p66 = scmp.ne.s32.totalorder %s57, %s58
      %p67 = scmp.eq.s32.totalorder %s26, 0
      %p68 = por %p66, %p67
      %p69 = scmp.ne.s32.totalorder %s57, %s58
      %p70 = scmp.eq.s32.totalorder %s27, 1
      %p71 = por %p69, %p70
      %p73 = scmp.ne.s32.totalorder %s58, %s72
      %p74 = scmp.eq.s32.totalorder %s27, 0
      %p75 = por %p73, %p74
      %s77 = sadd.s32 %s76, 1
      %p80 = scmp.eq.s32.totalorder %s21, 1
      %p81 = scmp.ne.s32.totalorder %s76, %s78
      %p82 = scmp.eq.s32.totalorder %s21, 0
      %p83 = por %p81, %p82
      %p84 = scmp.ne.s32.totalorder %s76, %s78
      %p85 = scmp.eq.s32.totalorder %s26, 1
      %p86 = por %p84, %p85
      %p87 = scmp.ne.s32.totalorder %s78, %s79
      %p88 = scmp.eq.s32.totalorder %s26, 0
      %p89 = por %p87, %p88
      %p90 = scmp.ne.s32.totalorder %s78, %s79
      %p91 = scmp.eq.s32.totalorder %s27, 1
      %p92 = por %p90, %p91
      %p94 = scmp.ne.s32.totalorder %s79, %s93
      %p95 = scmp.eq.s32.totalorder %s27, 0
      %p96 = por %p94, %p95
      %s98 = sadd.s32 %s97, 1
      %p101 = scmp.eq.s32.totalorder %s21, 1
      %p102 = scmp.ne.s32.totalorder %s97, %s99
      %p103 = scmp.eq.s32.totalorder %s21, 0
      %p104 = por %p102, %p103
      %p105 = scmp.ne.s32.totalorder %s97, %s99
      %p106 = scmp.eq.s32.totalorder %s26, 1
      %p107 = por %p105, %p106
      %p108 = scmp.ne.s32.totalorder %s99, %s100
      %p109 = scmp.eq.s32.totalorder %s26, 0
      %p110 = por %p108, %p109
      %p111 = scmp.ne.s32.totalorder %s99, %s100
      %p112 = scmp.eq.s32.totalorder %s27, 1
      %p113 = por %p111, %p112
      %p115 = scmp.ne.s32.totalorder %s100, %s114
      %p116 = scmp.eq.s32.totalorder %s27, 0
      %p117 = por %p115, %p116
      %s119 = sadd.s32 %s118, 1
      %p122 = scmp.eq.s32.totalorder %s21, 1
      %p123 = scmp.ne.s32.totalorder %s118, %s120
      %p124 = scmp.eq.s32.totalorder %s21, 0
      %p125 = por %p123, %p124
      %p126 = scmp.ne.s32.totalorder %s118, %s120
      %p127 = scmp.eq.s32.totalorder %s26, 1
      %p128 = por %p126, %p127
      %p129 = scmp.ne.s32.totalorder %s120, %s121
      %p130 = scmp.eq.s32.totalorder %s26, 0
      %p131 = por %p129, %p130
      %p132 = scmp.ne.s32.totalorder %s120, %s121
      %p133 = scmp.eq.s32.totalorder %s27, 1
      %p134 = por %p132, %p133
      %p136 = scmp.ne.s32.totalorder %s121, %s135
      %p137 = scmp.eq.s32.totalorder %s27, 0
      %p138 = por %p136, %p137
      %s140 = sadd.s32 %s139, 1
      %p143 = scmp.eq.s32.totalorder %s21, 1
      %p144 = scmp.ne.s32.totalorder %s139, %s141
      %p145 = scmp.eq.s32.totalorder %s21, 0
      %p146 = por %p144, %p145
      %p147 = scmp.ne.s32.totalorder %s139, %s141
      %p148 = scmp.eq.s32.totalorder %s26, 1
      %p149 = por %p147, %p148
      %p150 = scmp.ne.s32.totalorder %s141, %s142
      %p151 = scmp.eq.s32.totalorder %s26, 0
      %p152 = por %p150, %p151
      %p153 = scmp.ne.s32.totalorder %s141, %s142
      %p154 = scmp.eq.s32.totalorder %s27, 1
      %p155 = por %p153, %p154
      %p157 = scmp.ne.s32.totalorder %s142, %s156
      %p158 = scmp.eq.s32.totalorder %s27, 0
      %p159 = por %p157, %p158
      %s161 = sadd.s32 %s160, 1
      %p164 = scmp.eq.s32.totalorder %s21, 1
      %p165 = scmp.ne.s32.totalorder %s160, %s162
      %p166 = scmp.eq.s32.totalorder %s21, 0
      %p167 = por %p165, %p166
      %p168 = scmp.ne.s32.totalorder %s160, %s162
      %p169 = scmp.eq.s32.totalorder %s26, 1
      %p170 = por %p168, %p169
      %p171 = scmp.ne.s32.totalorder %s162, %s163
      %p172 = scmp.eq.s32.totalorder %s26, 0
      %p173 = por %p171, %p172
      %p174 = scmp.ne.s32.totalorder %s162, %s163
      %p175 = scmp.eq.s32.totalorder %s27, 1
      %p176 = por %p174, %p175
      %p178 = scmp.ne.s32.totalorder %s163, %s177
      %p179 = scmp.eq.s32.totalorder %s27, 0
      %p180 = por %p178, %p179
      %s181 = ssub.s32 %s21, %s28
      %p182 = scmp.eq.s32.totalorder %s181, 0
      %s184 = sadd.s32 %s183, 1
      %s185 = scalar_select %p182, %s183, %s184
      %p188 = pneg %p182
      %p189 = scmp.eq.s32.totalorder %s21, 1
      %p190 = por %p188, %p189
      %p191 = scmp.ne.s32.totalorder %s183, %s186
      %p192 = scmp.eq.s32.totalorder %s21, 0
      %p193 = por %p191, %p192
      %p194 = scmp.ne.s32.totalorder %s183, %s186
      %p195 = scmp.eq.s32.totalorder %s26, 1
      %p196 = por %p194, %p195
      %p197 = scmp.ne.s32.totalorder %s186, %s187
      %p198 = scmp.eq.s32.totalorder %s26, 0
      %p199 = por %p197, %p198
      %p200 = scmp.ne.s32.totalorder %s186, %s187
      %p201 = scmp.eq.s32.totalorder %s27, 1
      %p202 = por %p200, %p201
      %p204 = scmp.ne.s32.totalorder %s187, %s203
      %p205 = scmp.eq.s32.totalorder %s27, 0
      %p206 = por %p204, %p205
      %p207 = scmp.le.s32.totalorder 1, %s21
      %p208 = scmp.lt.s32.totalorder %s21, 3
      %p209 = pnand %p207, %p208
      %p210 = pneg %p209
      // Predicated region
      $region9: #{tpu_custom_call.1} parent=5 // pred_check
        _
      $region10: #{tpu_custom_call.1} parent=5 // pred_check_branch
        %212 = sbr.rel (%p209) target = $region12
      $region11: #{tpu_custom_call.1} parent=5 // pred_region
        %s213 = ssub.s32 %s21, 1
        // Predicated region
        $region13: #{tpu_custom_call.1} parent=11 // pred_check
          %p214 = pneg %p68
        $region14: #{tpu_custom_call.1} parent=11 // pred_check_branch
          %216 = sbr.rel (%p214) target = $region16
        $region15: #{tpu_custom_call.1} parent=11 // pred_region
          %s218 = ssub.s32 8192, 8192
          %219 = vsyncadd [#allocation6], %s218
          %s220 = sshll.u32 [#allocation5], 4
          %s221 = int_to_ptr.vmem [resolvable:$true] %s220
          %226 = dma.hbm_to_vmem [thread:$0]  %s1, 8192, %s221, [#allocation6], 256, 256, 16
        $region16: #{tpu_custom_call.1} parent=11 // pred_fallthru
          _
        // Predicated region
        $region17: #{tpu_custom_call.1} parent=11 // pred_check
          %p227 = pneg %p89
        $region18: #{tpu_custom_call.1} parent=11 // pred_check_branch
          %229 = sbr.rel (%p227) target = $region20
        $region19: #{tpu_custom_call.1} parent=11 // pred_region
          _
        $region20: #{tpu_custom_call.1} parent=11 // pred_fallthru
          _
        // Predicated region
        $region21: #{tpu_custom_call.1} parent=11 // pred_check
          %p230 = pneg %p110
        $region22: #{tpu_custom_call.1} parent=11 // pred_check_branch
          %232 = sbr.rel (%p230) target = $region24
        $region23: #{tpu_custom_call.1} parent=11 // pred_region
          %s234 = ssub.s32 8192, 8192
          %235 = vsyncadd [#allocation6], %s234
          %s236 = sshll.u32 [#allocation7], 4
          %s237 = int_to_ptr.vmem [resolvable:$true] %s236
          %242 = dma.hbm_to_vmem [thread:$0]  %s3, 8192, %s237, [#allocation6], 128, 128, 8
        $region24: #{tpu_custom_call.1} parent=11 // pred_fallthru
          _
        // Predicated region
        $region25: #{tpu_custom_call.1} parent=11 // pred_check
          %p243 = pneg %p131
        $region26: #{tpu_custom_call.1} parent=11 // pred_check_branch
          %245 = sbr.rel (%p243) target = $region28
        $region27: #{tpu_custom_call.1} parent=11 // pred_region
          _
        $region28: #{tpu_custom_call.1} parent=11 // pred_fallthru
          _
        // Predicated region
        $region29: #{tpu_custom_call.1} parent=11 // pred_check
          %p246 = pneg %p152
        $region30: #{tpu_custom_call.1} parent=11 // pred_check_branch
          %248 = sbr.rel (%p246) target = $region32
        $region31: #{tpu_custom_call.1} parent=11 // pred_region
          %s250 = ssub.s32 2048, 2048
          %251 = vsyncadd [#allocation9], %s250
          %s252 = sshll.u32 [#allocation8], 4
          %s253 = int_to_ptr.vmem [resolvable:$true] %s252
          %258 = dma.hbm_to_vmem [thread:$0]  %s5, 2048, %s253, [#allocation9], 64, 64, 4
        $region32: #{tpu_custom_call.1} parent=11 // pred_fallthru
          _
        // Predicated region
        $region33: #{tpu_custom_call.1} parent=11 // pred_check
          %p259 = pneg %p173
        $region34: #{tpu_custom_call.1} parent=11 // pred_check_branch
          %261 = sbr.rel (%p259) target = $region36
        $region35: #{tpu_custom_call.1} parent=11 // pred_region
          %s263 = ssub.s32 4096, 4096
          %264 = vsyncadd [#allocation9], %s263
          %s265 = sshll.u32 [#allocation10], 4
          %s266 = int_to_ptr.vmem [resolvable:$true] %s265
          %271 = dma.hbm_to_vmem [thread:$0]  %s6, 4096, %s266, [#allocation9], 256, 256, 16
        $region36: #{tpu_custom_call.1} parent=11 // pred_fallthru
          _
      $region12: #{tpu_custom_call.1} parent=5 // pred_fallthru
        _
      %p272 = scmp.lt.s32.totalorder %s21, 2
      // Predicated region
      $region37: #{tpu_custom_call.1} parent=5 // pred_check
        %p273 = pneg %p272
      $region38: #{tpu_custom_call.1} parent=5 // pred_check_branch
        %275 = sbr.rel (%p273) target = $region40
      $region39: #{tpu_custom_call.1} parent=5 // pred_region
        // Predicated region
        $region41: #{tpu_custom_call.1} parent=39 // pred_check
          %p276 = pneg %p41
        $region42: #{tpu_custom_call.1} parent=39 // pred_check_branch
          %278 = sbr.rel (%p276) target = $region44
        $region43: #{tpu_custom_call.1} parent=39 // pred_region
          %s279 = sand.u32 %s31, 1
          %s280 = scalar_lea.sflag [#allocation3], %s279
          %s281 = sand.u32 %s31, 1
          %s282 = smul.addr %s281, 16
          %s283 = scalar_lea.vmem [#allocation2], %s282
          %s285 = ssub.s32 256, 256
          %286 = vsyncadd %s280, %s285
          %s287 = smul.addr %s21, 2
          %s288 = smul.addr %s287, 128
          %s289 = scalar_lea.hbm %s0, %s288
          %s291 = sshll.u32 %s283, 4
          %s292 = int_to_ptr.vmem [resolvable:$true] %s291
          %294 = dma.hbm_to_vmem [thread:$0]  %s289, 256, %s292, %s280
        $region44: #{tpu_custom_call.1} parent=39 // pred_fallthru
          _
      $region40: #{tpu_custom_call.1} parent=5 // pred_fallthru
        _
      %p295 = scmp.le.s32.totalorder 1, %s21
      %p296 = scmp.lt.s32.totalorder %s21, 3
      %p297 = pnand %p295, %p296
      %p298 = pneg %p297
      // Predicated region
      $region45: #{tpu_custom_call.1} parent=5 // pred_check
        _
      $region46: #{tpu_custom_call.1} parent=5 // pred_check_branch
        %300 = sbr.rel (%p297) target = $region48
      $region47: #{tpu_custom_call.1} parent=5 // pred_region
        %s301 = ssub.s32 %s21, 1
        %s302 = sand.u32 %s34, 1
        %s303 = scalar_lea.sflag [#allocation3], %s302
        %s304 = sand.u32 %s34, 1
        %s305 = smul.addr %s304, 16
        %s306 = scalar_lea.vmem [#allocation2], %s305
        // Predicated region
        $region49: #{tpu_custom_call.1} parent=47 // pred_check
          %p307 = pneg %p47
        $region50: #{tpu_custom_call.1} parent=47 // pred_check_branch
          %309 = sbr.rel (%p307) target = $region52
        $region51: #{tpu_custom_call.1} parent=47 // pred_region
          %310 = dma.done %s303, 256
        $region52: #{tpu_custom_call.1} parent=47 // pred_fallthru
          _
        // Predicated region
        $region53: #{tpu_custom_call.1} parent=47 // pred_check
          %p311 = pneg %p68
        $region54: #{tpu_custom_call.1} parent=47 // pred_check_branch
          %313 = sbr.rel (%p311) target = $region56
        $region55: #{tpu_custom_call.1} parent=47 // pred_region
          %314 = dma.done [#allocation6], 8192
        $region56: #{tpu_custom_call.1} parent=47 // pred_fallthru
          _
        // Predicated region
        $region57: #{tpu_custom_call.1} parent=47 // pred_check
          %p315 = pneg %p110
        $region58: #{tpu_custom_call.1} parent=47 // pred_check_branch
          %317 = sbr.rel (%p315) target = $region60
        $region59: #{tpu_custom_call.1} parent=47 // pred_region
          %318 = dma.done [#allocation6], 8192
        $region60: #{tpu_custom_call.1} parent=47 // pred_fallthru
          _
        // Predicated region
        $region61: #{tpu_custom_call.1} parent=47 // pred_check
          %p319 = pneg %p152
        $region62: #{tpu_custom_call.1} parent=47 // pred_check_branch
          %321 = sbr.rel (%p319) target = $region64
        $region63: #{tpu_custom_call.1} parent=47 // pred_region
          %322 = dma.done [#allocation9], 2048
        $region64: #{tpu_custom_call.1} parent=47 // pred_fallthru
          _
        // Predicated region
        $region65: #{tpu_custom_call.1} parent=47 // pred_check
          %p323 = pneg %p173
        $region66: #{tpu_custom_call.1} parent=47 // pred_check_branch
          %325 = sbr.rel (%p323) target = $region68
        $region67: #{tpu_custom_call.1} parent=47 // pred_region
          %326 = dma.done [#allocation9], 4096
        $region68: #{tpu_custom_call.1} parent=47 // pred_fallthru
          _
        %s327 = sand.u32 %s34, 1
        %s328 = scalar_lea.sflag [#allocation3], %s327
        %s329 = sand.u32 %s34, 1
        %s330 = smul.addr %s329, 16
        %s331 = scalar_lea.vmem [#allocation2], %s330
        %p332 = pneg %p47
        %p333 = pneg %p44
        %p334 = pneg %p68
        %p335 = pneg %p65
        %p336 = pneg %p89
        %p337 = pneg %p86
        %p338 = pneg %p110
        %p339 = pneg %p107
        %p340 = pneg %p131
        %p341 = pneg %p128
        %p342 = pneg %p152
        %p343 = pneg %p149
        %p344 = pneg %p173
        %p345 = pneg %p170
        %p346 = pneg %p199
        %p347 = pneg %p196
        %s348 = sand.u32 %s186, 1
        %s349 = scalar_lea.sflag [#allocation4], %s348
        %s350 = sand.u32 %s186, 1
        %s351 = smul.addr %s350, 16
        %s352 = scalar_lea.vmem [#allocation11], %s351
        %v354 = vld [vmem:[%s306] sm:$0xff]
        %v355 = vld [vmem:[%s306 + $0x8] sm:$0xff]
        %v356 = vpack.c.bf16 %v354, %v354
        %v357 = vpack.c.bf16 %v355, %v355
        %v358 = vld [vmem:[#allocation5] sm:$0xff]
        %v359 = vld [vmem:[#allocation5 + $0x8] sm:$0xff]
        %v360 = vld [vmem:[#allocation5 + $0x10] sm:$0xff]
        %v361 = vld [vmem:[#allocation5 + $0x18] sm:$0xff]
        %v362 = vld [vmem:[#allocation5 + $0x20] sm:$0xff]
        %v363 = vld [vmem:[#allocation5 + $0x28] sm:$0xff]
        %v364 = vld [vmem:[#allocation5 + $0x30] sm:$0xff]
        %v365 = vld [vmem:[#allocation5 + $0x38] sm:$0xff]
        %v366 = vld [vmem:[#allocation5 + $0x40] sm:$0xff]
        %v367 = vld [vmem:[#allocation5 + $0x48] sm:$0xff]
        %v368 = vld [vmem:[#allocation5 + $0x50] sm:$0xff]
        %v369 = vld [vmem:[#allocation5 + $0x58] sm:$0xff]
        %v370 = vld [vmem:[#allocation5 + $0x60] sm:$0xff]
        %v371 = vld [vmem:[#allocation5 + $0x68] sm:$0xff]
        %v372 = vld [vmem:[#allocation5 + $0x70] sm:$0xff]
        %v373 = vld [vmem:[#allocation5 + $0x78] sm:$0xff]
        %v374 = vld [vmem:[#allocation5 + $0x80] sm:$0xff]
        %v375 = vld [vmem:[#allocation5 + $0x88] sm:$0xff]
        %v376 = vld [vmem:[#allocation5 + $0x90] sm:$0xff]
        %v377 = vld [vmem:[#allocation5 + $0x98] sm:$0xff]
        %v378 = vld [vmem:[#allocation5 + $0xa0] sm:$0xff]
        %v379 = vld [vmem:[#allocation5 + $0xa8] sm:$0xff]
        %v380 = vld [vmem:[#allocation5 + $0xb0] sm:$0xff]
        %v381 = vld [vmem:[#allocation5 + $0xb8] sm:$0xff]
        %v382 = vld [vmem:[#allocation5 + $0xc0] sm:$0xff]
        %v383 = vld [vmem:[#allocation5 + $0xc8] sm:$0xff]
        %v384 = vld [vmem:[#allocation5 + $0xd0] sm:$0xff]
        %v385 = vld [vmem:[#allocation5 + $0xd8] sm:$0xff]
        %v386 = vld [vmem:[#allocation5 + $0xe0] sm:$0xff]
        %v387 = vld [vmem:[#allocation5 + $0xe8] sm:$0xff]
        %v388 = vld [vmem:[#allocation5 + $0xf0] sm:$0xff]
        %v389 = vld [vmem:[#allocation5 + $0xf8] sm:$0xff]
        %v390 = vld [vmem:[#allocation5 + $0x100] sm:$0xff]
        %v391 = vld [vmem:[#allocation5 + $0x108] sm:$0xff]
        %v392 = vld [vmem:[#allocation5 + $0x110] sm:$0xff]
        %v393 = vld [vmem:[#allocation5 + $0x118] sm:$0xff]
        %v394 = vld [vmem:[#allocation5 + $0x120] sm:$0xff]
        %v395 = vld [vmem:[#allocation5 + $0x128] sm:$0xff]
        %v396 = vld [vmem:[#allocation5 + $0x130] sm:$0xff]
        %v397 = vld [vmem:[#allocation5 + $0x138] sm:$0xff]
        %v398 = vld [vmem:[#allocation5 + $0x140] sm:$0xff]
        %v399 = vld [vmem:[#allocation5 + $0x148] sm:$0xff]
        %v400 = vld [vmem:[#allocation5 + $0x150] sm:$0xff]
        %v401 = vld [vmem:[#allocation5 + $0x158] sm:$0xff]
        %v402 = vld [vmem:[#allocation5 + $0x160] sm:$0xff]
        %v403 = vld [vmem:[#allocation5 + $0x168] sm:$0xff]
        %v404 = vld [vmem:[#allocation5 + $0x170] sm:$0xff]
        %v405 = vld [vmem:[#allocation5 + $0x178] sm:$0xff]
        %v406 = vld [vmem:[#allocation5 + $0x180] sm:$0xff]
        %v407 = vld [vmem:[#allocation5 + $0x188] sm:$0xff]
        %v408 = vld [vmem:[#allocation5 + $0x190] sm:$0xff]
        %v409 = vld [vmem:[#allocation5 + $0x198] sm:$0xff]
        %v410 = vld [vmem:[#allocation5 + $0x1a0] sm:$0xff]
        %v411 = vld [vmem:[#allocation5 + $0x1a8] sm:$0xff]
        %v412 = vld [vmem:[#allocation5 + $0x1b0] sm:$0xff]
        %v413 = vld [vmem:[#allocation5 + $0x1b8] sm:$0xff]
        %v414 = vld [vmem:[#allocation5 + $0x1c0] sm:$0xff]
        %v415 = vld [vmem:[#allocation5 + $0x1c8] sm:$0xff]
        %v416 = vld [vmem:[#allocation5 + $0x1d0] sm:$0xff]
        %v417 = vld [vmem:[#allocation5 + $0x1d8] sm:$0xff]
        %v418 = vld [vmem:[#allocation5 + $0x1e0] sm:$0xff]
        %v419 = vld [vmem:[#allocation5 + $0x1e8] sm:$0xff]
        %v420 = vld [vmem:[#allocation5 + $0x1f0] sm:$0xff]
        %v421 = vld [vmem:[#allocation5 + $0x1f8] sm:$0xff]
        %v422 = vld [vmem:[%s2] sm:$0xf]
        %v424 = vlaneseq
        %v425 = vshrl.u32 %v424, 7
        %v426 = vsub.s32 0, %v425
        %v427 = vrot.slane %v422, %v426
        %v428 = vlaneseq
        %v429 = vshrl.u32 %v428, 7
        %v430 = vsub.s32 1, %v429
        %v431 = vrot.slane %v422, %v430
        %v432 = vlaneseq
        %v433 = vshrl.u32 %v432, 7
        %v434 = vsub.s32 2, %v433
        %v435 = vrot.slane %v422, %v434
        %v436 = vlaneseq
        %v437 = vshrl.u32 %v436, 7
        %v438 = vsub.s32 3, %v437
        %v439 = vrot.slane %v422, %v438
        %v508 = vunpack.c.l.b16 %v358
        %v509 = vunpack.c.h.b16 %v358
        %v510 = vunpack.c.l.b16 %v359
        %v511 = vunpack.c.h.b16 %v359
        %v512 = vunpack.c.l.b16 %v360
        %v513 = vunpack.c.h.b16 %v360
        %v514 = vunpack.c.l.b16 %v361
        %v515 = vunpack.c.h.b16 %v361
        %v516 = vunpack.c.l.b16 %v362
        %v517 = vunpack.c.h.b16 %v362
        %v518 = vunpack.c.l.b16 %v363
        %v519 = vunpack.c.h.b16 %v363
        %v520 = vunpack.c.l.b16 %v364
        %v521 = vunpack.c.h.b16 %v364
        %v522 = vunpack.c.l.b16 %v365
        %v523 = vunpack.c.h.b16 %v365
        %v524 = vunpack.c.l.b16 %v366
        %v525 = vunpack.c.h.b16 %v366
        %v526 = vunpack.c.l.b16 %v367
        %v527 = vunpack.c.h.b16 %v367
        %v528 = vunpack.c.l.b16 %v368
        %v529 = vunpack.c.h.b16 %v368
        %v530 = vunpack.c.l.b16 %v369
        %v531 = vunpack.c.h.b16 %v369
        %v532 = vunpack.c.l.b16 %v370
        %v533 = vunpack.c.h.b16 %v370
        %v534 = vunpack.c.l.b16 %v371
        %v535 = vunpack.c.h.b16 %v371
        %v536 = vunpack.c.l.b16 %v372
        %v537 = vunpack.c.h.b16 %v372
        %v538 = vunpack.c.l.b16 %v373
        %v539 = vunpack.c.h.b16 %v373
        %v540 = vunpack.c.l.b16 %v374
        %v541 = vunpack.c.h.b16 %v374
        %v542 = vunpack.c.l.b16 %v375
        %v543 = vunpack.c.h.b16 %v375
        %v544 = vunpack.c.l.b16 %v376
        %v545 = vunpack.c.h.b16 %v376
        %v546 = vunpack.c.l.b16 %v377
        %v547 = vunpack.c.h.b16 %v377
        %v548 = vunpack.c.l.b16 %v378
        %v549 = vunpack.c.h.b16 %v378
        %v550 = vunpack.c.l.b16 %v379
        %v551 = vunpack.c.h.b16 %v379
        %v552 = vunpack.c.l.b16 %v380
        %v553 = vunpack.c.h.b16 %v380
        %v554 = vunpack.c.l.b16 %v381
        %v555 = vunpack.c.h.b16 %v381
        %v556 = vunpack.c.l.b16 %v382
        %v557 = vunpack.c.h.b16 %v382
        %v558 = vunpack.c.l.b16 %v383
        %v559 = vunpack.c.h.b16 %v383
        %v560 = vunpack.c.l.b16 %v384
        %v561 = vunpack.c.h.b16 %v384
        %v562 = vunpack.c.l.b16 %v385
        %v563 = vunpack.c.h.b16 %v385
        %v564 = vunpack.c.l.b16 %v386
        %v565 = vunpack.c.h.b16 %v386
        %v566 = vunpack.c.l.b16 %v387
        %v567 = vunpack.c.h.b16 %v387
        %v568 = vunpack.c.l.b16 %v388
        %v569 = vunpack.c.h.b16 %v388
        %v570 = vunpack.c.l.b16 %v389
        %v571 = vunpack.c.h.b16 %v389
        %v572 = vunpack.c.l.b16 %v390
        %v573 = vunpack.c.h.b16 %v390
        %v574 = vunpack.c.l.b16 %v391
        %v575 = vunpack.c.h.b16 %v391
        %v576 = vunpack.c.l.b16 %v392
        %v577 = vunpack.c.h.b16 %v392
        %v578 = vunpack.c.l.b16 %v393
        %v579 = vunpack.c.h.b16 %v393
        %v580 = vunpack.c.l.b16 %v394
        %v581 = vunpack.c.h.b16 %v394
        %v582 = vunpack.c.l.b16 %v395
        %v583 = vunpack.c.h.b16 %v395
        %v584 = vunpack.c.l.b16 %v396
        %v585 = vunpack.c.h.b16 %v396
        %v586 = vunpack.c.l.b16 %v397
        %v587 = vunpack.c.h.b16 %v397
        %v588 = vunpack.c.l.b16 %v398
        %v589 = vunpack.c.h.b16 %v398
        %v590 = vunpack.c.l.b16 %v399
        %v591 = vunpack.c.h.b16 %v399
        %v592 = vunpack.c.l.b16 %v400
        %v593 = vunpack.c.h.b16 %v400
        %v594 = vunpack.c.l.b16 %v401
        %v595 = vunpack.c.h.b16 %v401
        %v596 = vunpack.c.l.b16 %v402
        %v597 = vunpack.c.h.b16 %v402
        %v598 = vunpack.c.l.b16 %v403
        %v599 = vunpack.c.h.b16 %v403
        %v600 = vunpack.c.l.b16 %v404
        %v601 = vunpack.c.h.b16 %v404
        %v602 = vunpack.c.l.b16 %v405
        %v603 = vunpack.c.h.b16 %v405
        %v604 = vunpack.c.l.b16 %v406
        %v605 = vunpack.c.h.b16 %v406
        %v606 = vunpack.c.l.b16 %v407
        %v607 = vunpack.c.h.b16 %v407
        %v608 = vunpack.c.l.b16 %v408
        %v609 = vunpack.c.h.b16 %v408
        %v610 = vunpack.c.l.b16 %v409
        %v611 = vunpack.c.h.b16 %v409
        %v612 = vunpack.c.l.b16 %v410
        %v613 = vunpack.c.h.b16 %v410
        %v614 = vunpack.c.l.b16 %v411
        %v615 = vunpack.c.h.b16 %v411
        %v616 = vunpack.c.l.b16 %v412
        %v617 = vunpack.c.h.b16 %v412
        %v618 = vunpack.c.l.b16 %v413
        %v619 = vunpack.c.h.b16 %v413
        %v620 = vunpack.c.l.b16 %v414
        %v621 = vunpack.c.h.b16 %v414
        %v622 = vunpack.c.l.b16 %v415
        %v623 = vunpack.c.h.b16 %v415
        %v624 = vunpack.c.l.b16 %v416
        %v625 = vunpack.c.h.b16 %v416
        %v626 = vunpack.c.l.b16 %v417
        %v627 = vunpack.c.h.b16 %v417
        %v628 = vunpack.c.l.b16 %v418
        %v629 = vunpack.c.h.b16 %v418
        %v630 = vunpack.c.l.b16 %v419
        %v631 = vunpack.c.h.b16 %v419
        %v632 = vunpack.c.l.b16 %v420
        %v633 = vunpack.c.h.b16 %v420
        %v634 = vunpack.c.l.b16 %v421
        %v635 = vunpack.c.h.b16 %v421
        %v636 = vpack.c.b16 %v512, %v508
        %v637 = vpack.c.b16 %v513, %v509
        %v638 = vpack.c.b16 %v514, %v510
        %v639 = vpack.c.b16 %v515, %v511
        %v640 = vpack.c.b16 %v520, %v516
        %v641 = vpack.c.b16 %v521, %v517
        %v642 = vpack.c.b16 %v522, %v518
        %v643 = vpack.c.b16 %v523, %v519
        %v644 = vpack.c.b16 %v528, %v524
        %v645 = vpack.c.b16 %v529, %v525
        %v646 = vpack.c.b16 %v530, %v526
        %v647 = vpack.c.b16 %v531, %v527
        %v648 = vpack.c.b16 %v536, %v532
        %v649 = vpack.c.b16 %v537, %v533
        %v650 = vpack.c.b16 %v538, %v534
        %v651 = vpack.c.b16 %v539, %v535
        %v652 = vpack.c.b16 %v544, %v540
        %v653 = vpack.c.b16 %v545, %v541
        %v654 = vpack.c.b16 %v546, %v542
        %v655 = vpack.c.b16 %v547, %v543
        %v656 = vpack.c.b16 %v552, %v548
        %v657 = vpack.c.b16 %v553, %v549
        %v658 = vpack.c.b16 %v554, %v550
        %v659 = vpack.c.b16 %v555, %v551
        %v660 = vpack.c.b16 %v560, %v556
        %v661 = vpack.c.b16 %v561, %v557
        %v662 = vpack.c.b16 %v562, %v558
        %v663 = vpack.c.b16 %v563, %v559
        %v664 = vpack.c.b16 %v568, %v564
        %v665 = vpack.c.b16 %v569, %v565
        %v666 = vpack.c.b16 %v570, %v566
        %v667 = vpack.c.b16 %v571, %v567
        %v668 = vpack.c.b16 %v576, %v572
        %v669 = vpack.c.b16 %v577, %v573
        %v670 = vpack.c.b16 %v578, %v574
        %v671 = vpack.c.b16 %v579, %v575
        %v672 = vpack.c.b16 %v584, %v580
        %v673 = vpack.c.b16 %v585, %v581
        %v674 = vpack.c.b16 %v586, %v582
        %v675 = vpack.c.b16 %v587, %v583
        %v676 = vpack.c.b16 %v592, %v588
        %v677 = vpack.c.b16 %v593, %v589
        %v678 = vpack.c.b16 %v594, %v590
        %v679 = vpack.c.b16 %v595, %v591
        %v680 = vpack.c.b16 %v600, %v596
        %v681 = vpack.c.b16 %v601, %v597
        %v682 = vpack.c.b16 %v602, %v598
        %v683 = vpack.c.b16 %v603, %v599
        %v684 = vpack.c.b16 %v608, %v604
        %v685 = vpack.c.b16 %v609, %v605
        %v686 = vpack.c.b16 %v610, %v606
        %v687 = vpack.c.b16 %v611, %v607
        %v688 = vpack.c.b16 %v616, %v612
        %v689 = vpack.c.b16 %v617, %v613
        %v690 = vpack.c.b16 %v618, %v614
        %v691 = vpack.c.b16 %v619, %v615
        %v692 = vpack.c.b16 %v624, %v620
        %v693 = vpack.c.b16 %v625, %v621
        %v694 = vpack.c.b16 %v626, %v622
        %v695 = vpack.c.b16 %v627, %v623
        %v696 = vpack.c.b16 %v632, %v628
        %v697 = vpack.c.b16 %v633, %v629
        %v698 = vpack.c.b16 %v634, %v630
        %v699 = vpack.c.b16 %v635, %v631
        %764 = vmatprep.subr.bf16.mxu0 %v637
        %765 = vmatpush1.bf16.msra.mxu0 %v636
        %766 = vmatprep.subr.bf16.mxu0 %v641
        %767 = vmatpush1.bf16.msra.mxu0 %v640
        %768 = vmatprep.subr.bf16.mxu0 %v645
        %769 = vmatpush1.bf16.msra.mxu0 %v644
        %770 = vmatprep.subr.bf16.mxu0 %v649
        %771 = vmatpush1.bf16.msra.mxu0 %v648
        %772 = vmatprep.subr.bf16.mxu0 %v653
        %773 = vmatpush1.bf16.msra.mxu0 %v652
        %774 = vmatprep.subr.bf16.mxu0 %v657
        %775 = vmatpush1.bf16.msra.mxu0 %v656
        %776 = vmatprep.subr.bf16.mxu0 %v661
        %777 = vmatpush1.bf16.msra.mxu0 %v660
        %778 = vmatprep.subr.bf16.mxu0 %v665
        %779 = vmatpush1.bf16.msra.mxu0 %v664
        %780 = vmatprep.subr.bf16.mxu0 %v669
        %781 = vmatpush1.bf16.msra.mxu0 %v668
        %782 = vmatprep.subr.bf16.mxu0 %v673
        %783 = vmatpush1.bf16.msra.mxu0 %v672
        %784 = vmatprep.subr.bf16.mxu0 %v677
        %785 = vmatpush1.bf16.msra.mxu0 %v676
        %786 = vmatprep.subr.bf16.mxu0 %v681
        %787 = vmatpush1.bf16.msra.mxu0 %v680
        %788 = vmatprep.subr.bf16.mxu0 %v685
        %789 = vmatpush1.bf16.msra.mxu0 %v684
        %790 = vmatprep.subr.bf16.mxu0 %v689
        %791 = vmatpush1.bf16.msra.mxu0 %v688
        %792 = vmatprep.subr.bf16.mxu0 %v693
        %793 = vmatpush1.bf16.msra.mxu0 %v692
        %794 = vmatprep.subr.bf16.mxu0 %v697
        %795 = vmatpush1.bf16.msra.mxu0 %v696
        %796 = vmatprep.mubr.bf16.mxu0 %v357
        %797 = vmatmul.mubr.bf16.gmra.mrb[0].mxu0 %v356
        %v798 = vpop.f32.mrb[0].mxu0
        %v799 = vadd.f32 %v427, %v798
        %v800 = vpop.f32.mrb[0].mxu0
        %v801 = vadd.f32 %v431, %v800
        %v802 = vpop.f32.mrb[0].mxu0
        %v803 = vpop.f32.mrb[0].mxu0
        %804 = vdwg.mxu0
        %805 = vmatprep.subr.bf16.mxu0 %v639
        %806 = vmatpush1.bf16.msra.mxu0 %v638
        %807 = vmatprep.subr.bf16.mxu0 %v643
        %808 = vmatpush1.bf16.msra.mxu0 %v642
        %809 = vmatprep.subr.bf16.mxu0 %v647
        %810 = vmatpush1.bf16.msra.mxu0 %v646
        %811 = vmatprep.subr.bf16.mxu0 %v651
        %812 = vmatpush1.bf16.msra.mxu0 %v650
        %813 = vmatprep.subr.bf16.mxu0 %v655
        %814 = vmatpush1.bf16.msra.mxu0 %v654
        %815 = vmatprep.subr.bf16.mxu0 %v659
        %816 = vmatpush1.bf16.msra.mxu0 %v658
        %817 = vmatprep.subr.bf16.mxu0 %v663
        %818 = vmatpush1.bf16.msra.mxu0 %v662
        %819 = vmatprep.subr.bf16.mxu0 %v667
        %820 = vmatpush1.bf16.msra.mxu0 %v666
        %821 = vmatprep.subr.bf16.mxu0 %v671
        %822 = vmatpush1.bf16.msra.mxu0 %v670
        %823 = vmatprep.subr.bf16.mxu0 %v675
        %824 = vmatpush1.bf16.msra.mxu0 %v674
        %825 = vmatprep.subr.bf16.mxu0 %v679
        %826 = vmatpush1.bf16.msra.mxu0 %v678
        %827 = vmatprep.subr.bf16.mxu0 %v683
        %828 = vmatpush1.bf16.msra.mxu0 %v682
        %829 = vmatprep.subr.bf16.mxu0 %v687
        %830 = vmatpush1.bf16.msra.mxu0 %v686
        %831 = vmatprep.subr.bf16.mxu0 %v691
        %832 = vmatpush1.bf16.msra.mxu0 %v690
        %833 = vmatprep.subr.bf16.mxu0 %v695
        %834 = vmatpush1.bf16.msra.mxu0 %v694
        %835 = vmatprep.subr.bf16.mxu0 %v699
        %836 = vmatpush1.bf16.msra.mxu0 %v698
        %837 = vmatprep.mubr.bf16.mxu0 %v357
        %838 = vmatmul.mubr.bf16.gmra.mrb[0].mxu0 %v356
        %v839 = vpop.f32.mrb[0].mxu0
        %v840 = vadd.f32 %v435, %v839
        %v841 = vpop.f32.mrb[0].mxu0
        %v842 = vadd.f32 %v439, %v841
        %v843 = vpop.f32.mrb[0].mxu0
        %v844 = vpop.f32.mrb[0].mxu0
        %845 = vdwg.mxu0
        %v846 = vmax.f32 %v799, 0.0
        %v847 = vmax.f32 %v801, 0.0
        %v848 = vmax.f32 %v840, 0.0
        %v849 = vmax.f32 %v842, 0.0
        %v850 = vpack.c.bf16 %v846, %v846
        %v851 = vpack.c.bf16 %v847, %v847
        %v852 = vpack.c.bf16 %v848, %v848
        %v853 = vpack.c.bf16 %v849, %v849
        %v854 = vld [vmem:[#allocation7] sm:$0xff]
        %v855 = vld [vmem:[#allocation7 + $0x8] sm:$0xff]
        %v856 = vld [vmem:[#allocation7 + $0x10] sm:$0xff]
        %v857 = vld [vmem:[#allocation7 + $0x18] sm:$0xff]
        %v858 = vld [vmem:[#allocation7 + $0x20] sm:$0xff]
        %v859 = vld [vmem:[#allocation7 + $0x28] sm:$0xff]
        %v860 = vld [vmem:[#allocation7 + $0x30] sm:$0xff]
        %v861 = vld [vmem:[#allocation7 + $0x38] sm:$0xff]
        %v862 = vld [vmem:[#allocation7 + $0x40] sm:$0xff]
        %v863 = vld [vmem:[#allocation7 + $0x48] sm:$0xff]
        %v864 = vld [vmem:[#allocation7 + $0x50] sm:$0xff]
        %v865 = vld [vmem:[#allocation7 + $0x58] sm:$0xff]
        %v866 = vld [vmem:[#allocation7 + $0x60] sm:$0xff]
        %v867 = vld [vmem:[#allocation7 + $0x68] sm:$0xff]
        %v868 = vld [vmem:[#allocation7 + $0x70] sm:$0xff]
        %v869 = vld [vmem:[#allocation7 + $0x78] sm:$0xff]
        %v870 = vld [vmem:[#allocation7 + $0x80] sm:$0xff]
        %v871 = vld [vmem:[#allocation7 + $0x88] sm:$0xff]
        %v872 = vld [vmem:[#allocation7 + $0x90] sm:$0xff]
        %v873 = vld [vmem:[#allocation7 + $0x98] sm:$0xff]
        %v874 = vld [vmem:[#allocation7 + $0xa0] sm:$0xff]
        %v875 = vld [vmem:[#allocation7 + $0xa8] sm:$0xff]
        %v876 = vld [vmem:[#allocation7 + $0xb0] sm:$0xff]
        %v877 = vld [vmem:[#allocation7 + $0xb8] sm:$0xff]
        %v878 = vld [vmem:[#allocation7 + $0xc0] sm:$0xff]
        %v879 = vld [vmem:[#allocation7 + $0xc8] sm:$0xff]
        %v880 = vld [vmem:[#allocation7 + $0xd0] sm:$0xff]
        %v881 = vld [vmem:[#allocation7 + $0xd8] sm:$0xff]
        %v882 = vld [vmem:[#allocation7 + $0xe0] sm:$0xff]
        %v883 = vld [vmem:[#allocation7 + $0xe8] sm:$0xff]
        %v884 = vld [vmem:[#allocation7 + $0xf0] sm:$0xff]
        %v885 = vld [vmem:[#allocation7 + $0xf8] sm:$0xff]
        %v886 = vld [vmem:[#allocation7 + $0x100] sm:$0xff]
        %v887 = vld [vmem:[#allocation7 + $0x108] sm:$0xff]
        %v888 = vld [vmem:[#allocation7 + $0x110] sm:$0xff]
        %v889 = vld [vmem:[#allocation7 + $0x118] sm:$0xff]
        %v890 = vld [vmem:[#allocation7 + $0x120] sm:$0xff]
        %v891 = vld [vmem:[#allocation7 + $0x128] sm:$0xff]
        %v892 = vld [vmem:[#allocation7 + $0x130] sm:$0xff]
        %v893 = vld [vmem:[#allocation7 + $0x138] sm:$0xff]
        %v894 = vld [vmem:[#allocation7 + $0x140] sm:$0xff]
        %v895 = vld [vmem:[#allocation7 + $0x148] sm:$0xff]
        %v896 = vld [vmem:[#allocation7 + $0x150] sm:$0xff]
        %v897 = vld [vmem:[#allocation7 + $0x158] sm:$0xff]
        %v898 = vld [vmem:[#allocation7 + $0x160] sm:$0xff]
        %v899 = vld [vmem:[#allocation7 + $0x168] sm:$0xff]
        %v900 = vld [vmem:[#allocation7 + $0x170] sm:$0xff]
        %v901 = vld [vmem:[#allocation7 + $0x178] sm:$0xff]
        %v902 = vld [vmem:[#allocation7 + $0x180] sm:$0xff]
        %v903 = vld [vmem:[#allocation7 + $0x188] sm:$0xff]
        %v904 = vld [vmem:[#allocation7 + $0x190] sm:$0xff]
        %v905 = vld [vmem:[#allocation7 + $0x198] sm:$0xff]
        %v906 = vld [vmem:[#allocation7 + $0x1a0] sm:$0xff]
        %v907 = vld [vmem:[#allocation7 + $0x1a8] sm:$0xff]
        %v908 = vld [vmem:[#allocation7 + $0x1b0] sm:$0xff]
        %v909 = vld [vmem:[#allocation7 + $0x1b8] sm:$0xff]
        %v910 = vld [vmem:[#allocation7 + $0x1c0] sm:$0xff]
        %v911 = vld [vmem:[#allocation7 + $0x1c8] sm:$0xff]
        %v912 = vld [vmem:[#allocation7 + $0x1d0] sm:$0xff]
        %v913 = vld [vmem:[#allocation7 + $0x1d8] sm:$0xff]
        %v914 = vld [vmem:[#allocation7 + $0x1e0] sm:$0xff]
        %v915 = vld [vmem:[#allocation7 + $0x1e8] sm:$0xff]
        %v916 = vld [vmem:[#allocation7 + $0x1f0] sm:$0xff]
        %v917 = vld [vmem:[#allocation7 + $0x1f8] sm:$0xff]
        %v982 = vunpack.c.l.b16 %v854
        %v983 = vunpack.c.h.b16 %v854
        %v984 = vunpack.c.l.b16 %v855
        %v985 = vunpack.c.h.b16 %v855
        %v986 = vunpack.c.l.b16 %v856
        %v987 = vunpack.c.h.b16 %v856
        %v988 = vunpack.c.l.b16 %v857
        %v989 = vunpack.c.h.b16 %v857
        %v990 = vunpack.c.l.b16 %v858
        %v991 = vunpack.c.h.b16 %v858
        %v992 = vunpack.c.l.b16 %v859
        %v993 = vunpack.c.h.b16 %v859
        %v994 = vunpack.c.l.b16 %v860
        %v995 = vunpack.c.h.b16 %v860
        %v996 = vunpack.c.l.b16 %v861
        %v997 = vunpack.c.h.b16 %v861
        %v998 = vunpack.c.l.b16 %v862
        %v999 = vunpack.c.h.b16 %v862
        %v1000 = vunpack.c.l.b16 %v863
        %v1001 = vunpack.c.h.b16 %v863
        %v1002 = vunpack.c.l.b16 %v864
        %v1003 = vunpack.c.h.b16 %v864
        %v1004 = vunpack.c.l.b16 %v865
        %v1005 = vunpack.c.h.b16 %v865
        %v1006 = vunpack.c.l.b16 %v866
        %v1007 = vunpack.c.h.b16 %v866
        %v1008 = vunpack.c.l.b16 %v867
        %v1009 = vunpack.c.h.b16 %v867
        %v1010 = vunpack.c.l.b16 %v868
        %v1011 = vunpack.c.h.b16 %v868
        %v1012 = vunpack.c.l.b16 %v869
        %v1013 = vunpack.c.h.b16 %v869
        %v1014 = vunpack.c.l.b16 %v870
        %v1015 = vunpack.c.h.b16 %v870
        %v1016 = vunpack.c.l.b16 %v871
        %v1017 = vunpack.c.h.b16 %v871
        %v1018 = vunpack.c.l.b16 %v872
        %v1019 = vunpack.c.h.b16 %v872
        %v1020 = vunpack.c.l.b16 %v873
        %v1021 = vunpack.c.h.b16 %v873
        %v1022 = vunpack.c.l.b16 %v874
        %v1023 = vunpack.c.h.b16 %v874
        %v1024 = vunpack.c.l.b16 %v875
        %v1025 = vunpack.c.h.b16 %v875
        %v1026 = vunpack.c.l.b16 %v876
        %v1027 = vunpack.c.h.b16 %v876
        %v1028 = vunpack.c.l.b16 %v877
        %v1029 = vunpack.c.h.b16 %v877
        %v1030 = vunpack.c.l.b16 %v878
        %v1031 = vunpack.c.h.b16 %v878
        %v1032 = vunpack.c.l.b16 %v879
        %v1033 = vunpack.c.h.b16 %v879
        %v1034 = vunpack.c.l.b16 %v880
        %v1035 = vunpack.c.h.b16 %v880
        %v1036 = vunpack.c.l.b16 %v881
        %v1037 = vunpack.c.h.b16 %v881
        %v1038 = vunpack.c.l.b16 %v882
        %v1039 = vunpack.c.h.b16 %v882
        %v1040 = vunpack.c.l.b16 %v883
        %v1041 = vunpack.c.h.b16 %v883
        %v1042 = vunpack.c.l.b16 %v884
        %v1043 = vunpack.c.h.b16 %v884
        %v1044 = vunpack.c.l.b16 %v885
        %v1045 = vunpack.c.h.b16 %v885
        %v1046 = vunpack.c.l.b16 %v886
        %v1047 = vunpack.c.h.b16 %v886
        %v1048 = vunpack.c.l.b16 %v887
        %v1049 = vunpack.c.h.b16 %v887
        %v1050 = vunpack.c.l.b16 %v888
        %v1051 = vunpack.c.h.b16 %v888
        %v1052 = vunpack.c.l.b16 %v889
        %v1053 = vunpack.c.h.b16 %v889
        %v1054 = vunpack.c.l.b16 %v890
        %v1055 = vunpack.c.h.b16 %v890
        %v1056 = vunpack.c.l.b16 %v891
        %v1057 = vunpack.c.h.b16 %v891
        %v1058 = vunpack.c.l.b16 %v892
        %v1059 = vunpack.c.h.b16 %v892
        %v1060 = vunpack.c.l.b16 %v893
        %v1061 = vunpack.c.h.b16 %v893
        %v1062 = vunpack.c.l.b16 %v894
        %v1063 = vunpack.c.h.b16 %v894
        %v1064 = vunpack.c.l.b16 %v895
        %v1065 = vunpack.c.h.b16 %v895
        %v1066 = vunpack.c.l.b16 %v896
        %v1067 = vunpack.c.h.b16 %v896
        %v1068 = vunpack.c.l.b16 %v897
        %v1069 = vunpack.c.h.b16 %v897
        %v1070 = vunpack.c.l.b16 %v898
        %v1071 = vunpack.c.h.b16 %v898
        %v1072 = vunpack.c.l.b16 %v899
        %v1073 = vunpack.c.h.b16 %v899
        %v1074 = vunpack.c.l.b16 %v900
        %v1075 = vunpack.c.h.b16 %v900
        %v1076 = vunpack.c.l.b16 %v901
        %v1077 = vunpack.c.h.b16 %v901
        %v1078 = vunpack.c.l.b16 %v902
        %v1079 = vunpack.c.h.b16 %v902
        %v1080 = vunpack.c.l.b16 %v903
        %v1081 = vunpack.c.h.b16 %v903
        %v1082 = vunpack.c.l.b16 %v904
        %v1083 = vunpack.c.h.b16 %v904
        %v1084 = vunpack.c.l.b16 %v905
        %v1085 = vunpack.c.h.b16 %v905
        %v1086 = vunpack.c.l.b16 %v906
        %v1087 = vunpack.c.h.b16 %v906
        %v1088 = vunpack.c.l.b16 %v907
        %v1089 = vunpack.c.h.b16 %v907
        %v1090 = vunpack.c.l.b16 %v908
        %v1091 = vunpack.c.h.b16 %v908
        %v1092 = vunpack.c.l.b16 %v909
        %v1093 = vunpack.c.h.b16 %v909
        %v1094 = vunpack.c.l.b16 %v910
        %v1095 = vunpack.c.h.b16 %v910
        %v1096 = vunpack.c.l.b16 %v911
        %v1097 = vunpack.c.h.b16 %v911
        %v1098 = vunpack.c.l.b16 %v912
        %v1099 = vunpack.c.h.b16 %v912
        %v1100 = vunpack.c.l.b16 %v913
        %v1101 = vunpack.c.h.b16 %v913
        %v1102 = vunpack.c.l.b16 %v914
        %v1103 = vunpack.c.h.b16 %v914
        %v1104 = vunpack.c.l.b16 %v915
        %v1105 = vunpack.c.h.b16 %v915
        %v1106 = vunpack.c.l.b16 %v916
        %v1107 = vunpack.c.h.b16 %v916
        %v1108 = vunpack.c.l.b16 %v917
        %v1109 = vunpack.c.h.b16 %v917
        %v1110 = vpack.c.b16 %v984, %v982
        %v1111 = vpack.c.b16 %v985, %v983
        %v1112 = vpack.c.b16 %v988, %v986
        %v1113 = vpack.c.b16 %v989, %v987
        %v1114 = vpack.c.b16 %v992, %v990
        %v1115 = vpack.c.b16 %v993, %v991
        %v1116 = vpack.c.b16 %v996, %v994
        %v1117 = vpack.c.b16 %v997, %v995
        %v1118 = vpack.c.b16 %v1000, %v998
        %v1119 = vpack.c.b16 %v1001, %v999
        %v1120 = vpack.c.b16 %v1004, %v1002
        %v1121 = vpack.c.b16 %v1005, %v1003
        %v1122 = vpack.c.b16 %v1008, %v1006
        %v1123 = vpack.c.b16 %v1009, %v1007
        %v1124 = vpack.c.b16 %v1012, %v1010
        %v1125 = vpack.c.b16 %v1013, %v1011
        %v1126 = vpack.c.b16 %v1016, %v1014
        %v1127 = vpack.c.b16 %v1017, %v1015
        %v1128 = vpack.c.b16 %v1020, %v1018
        %v1129 = vpack.c.b16 %v1021, %v1019
        %v1130 = vpack.c.b16 %v1024, %v1022
        %v1131 = vpack.c.b16 %v1025, %v1023
        %v1132 = vpack.c.b16 %v1028, %v1026
        %v1133 = vpack.c.b16 %v1029, %v1027
        %v1134 = vpack.c.b16 %v1032, %v1030
        %v1135 = vpack.c.b16 %v1033, %v1031
        %v1136 = vpack.c.b16 %v1036, %v1034
        %v1137 = vpack.c.b16 %v1037, %v1035
        %v1138 = vpack.c.b16 %v1040, %v1038
        %v1139 = vpack.c.b16 %v1041, %v1039
        %v1140 = vpack.c.b16 %v1044, %v1042
        %v1141 = vpack.c.b16 %v1045, %v1043
        %v1142 = vpack.c.b16 %v1048, %v1046
        %v1143 = vpack.c.b16 %v1049, %v1047
        %v1144 = vpack.c.b16 %v1052, %v1050
        %v1145 = vpack.c.b16 %v1053, %v1051
        %v1146 = vpack.c.b16 %v1056, %v1054
        %v1147 = vpack.c.b16 %v1057, %v1055
        %v1148 = vpack.c.b16 %v1060, %v1058
        %v1149 = vpack.c.b16 %v1061, %v1059
        %v1150 = vpack.c.b16 %v1064, %v1062
        %v1151 = vpack.c.b16 %v1065, %v1063
        %v1152 = vpack.c.b16 %v1068, %v1066
        %v1153 = vpack.c.b16 %v1069, %v1067
        %v1154 = vpack.c.b16 %v1072, %v1070
        %v1155 = vpack.c.b16 %v1073, %v1071
        %v1156 = vpack.c.b16 %v1076, %v1074
        %v1157 = vpack.c.b16 %v1077, %v1075
        %v1158 = vpack.c.b16 %v1080, %v1078
        %v1159 = vpack.c.b16 %v1081, %v1079
        %v1160 = vpack.c.b16 %v1084, %v1082
        %v1161 = vpack.c.b16 %v1085, %v1083
        %v1162 = vpack.c.b16 %v1088, %v1086
        %v1163 = vpack.c.b16 %v1089, %v1087
        %v1164 = vpack.c.b16 %v1092, %v1090
        %v1165 = vpack.c.b16 %v1093, %v1091
        %v1166 = vpack.c.b16 %v1096, %v1094
        %v1167 = vpack.c.b16 %v1097, %v1095
        %v1168 = vpack.c.b16 %v1100, %v1098
        %v1169 = vpack.c.b16 %v1101, %v1099
        %v1170 = vpack.c.b16 %v1104, %v1102
        %v1171 = vpack.c.b16 %v1105, %v1103
        %v1172 = vpack.c.b16 %v1108, %v1106
        %v1173 = vpack.c.b16 %v1109, %v1107
        %1238 = vmatprep.subr.bf16.mxu0 %v1111
        %1239 = vmatpush1.bf16.msra.mxu0 %v1110
        %1240 = vmatprep.subr.bf16.mxu0 %v1113
        %1241 = vmatpush1.bf16.msra.mxu0 %v1112
        %1242 = vmatprep.subr.bf16.mxu0 %v1115
        %1243 = vmatpush1.bf16.msra.mxu0 %v1114
        %1244 = vmatprep.subr.bf16.mxu0 %v1117
        %1245 = vmatpush1.bf16.msra.mxu0 %v1116
        %1246 = vmatprep.subr.bf16.mxu0 %v1119
        %1247 = vmatpush1.bf16.msra.mxu0 %v1118
        %1248 = vmatprep.subr.bf16.mxu0 %v1121
        %1249 = vmatpush1.bf16.msra.mxu0 %v1120
        %1250 = vmatprep.subr.bf16.mxu0 %v1123
        %1251 = vmatpush1.bf16.msra.mxu0 %v1122
        %1252 = vmatprep.subr.bf16.mxu0 %v1125
        %1253 = vmatpush1.bf16.msra.mxu0 %v1124
        %1254 = vmatprep.subr.bf16.mxu0 %v1127
        %1255 = vmatpush1.bf16.msra.mxu0 %v1126
        %1256 = vmatprep.subr.bf16.mxu0 %v1129
        %1257 = vmatpush1.bf16.msra.mxu0 %v1128
        %1258 = vmatprep.subr.bf16.mxu0 %v1131
        %1259 = vmatpush1.bf16.msra.mxu0 %v1130
        %1260 = vmatprep.subr.bf16.mxu0 %v1133
        %1261 = vmatpush1.bf16.msra.mxu0 %v1132
        %1262 = vmatprep.subr.bf16.mxu0 %v1135
        %1263 = vmatpush1.bf16.msra.mxu0 %v1134
        %1264 = vmatprep.subr.bf16.mxu0 %v1137
        %1265 = vmatpush1.bf16.msra.mxu0 %v1136
        %1266 = vmatprep.subr.bf16.mxu0 %v1139
        %1267 = vmatpush1.bf16.msra.mxu0 %v1138
        %1268 = vmatprep.subr.bf16.mxu0 %v1141
        %1269 = vmatpush1.bf16.msra.mxu0 %v1140
        %1270 = vmatprep.mubr.bf16.mxu0 %v851
        %1271 = vmatmul.mubr.bf16.gmra.mrb[0].mxu0 %v850
        %v1272 = vpop.f32.mrb[0].mxu0
        %v1273 = vadd.f32 0.0, %v1272
        %v1274 = vpop.f32.mrb[0].mxu0
        %v1275 = vadd.f32 0.0, %v1274
        %v1276 = vpop.f32.mrb[0].mxu0
        %v1277 = vpop.f32.mrb[0].mxu0
        %1278 = vdwg.mxu0
        %1279 = vmatprep.subr.bf16.mxu0 %v1143
        %1280 = vmatpush1.bf16.msra.mxu0 %v1142
        %1281 = vmatprep.subr.bf16.mxu0 %v1145
        %1282 = vmatpush1.bf16.msra.mxu0 %v1144
        %1283 = vmatprep.subr.bf16.mxu0 %v1147
        %1284 = vmatpush1.bf16.msra.mxu0 %v1146
        %1285 = vmatprep.subr.bf16.mxu0 %v1149
        %1286 = vmatpush1.bf16.msra.mxu0 %v1148
        %1287 = vmatprep.subr.bf16.mxu0 %v1151
        %1288 = vmatpush1.bf16.msra.mxu0 %v1150
        %1289 = vmatprep.subr.bf16.mxu0 %v1153
        %1290 = vmatpush1.bf16.msra.mxu0 %v1152
        %1291 = vmatprep.subr.bf16.mxu0 %v1155
        %1292 = vmatpush1.bf16.msra.mxu0 %v1154
        %1293 = vmatprep.subr.bf16.mxu0 %v1157
        %1294 = vmatpush1.bf16.msra.mxu0 %v1156
        %1295 = vmatprep.subr.bf16.mxu0 %v1159
        %1296 = vmatpush1.bf16.msra.mxu0 %v1158
        %1297 = vmatprep.subr.bf16.mxu0 %v1161
        %1298 = vmatpush1.bf16.msra.mxu0 %v1160
        %1299 = vmatprep.subr.bf16.mxu0 %v1163
        %1300 = vmatpush1.bf16.msra.mxu0 %v1162
        %1301 = vmatprep.subr.bf16.mxu0 %v1165
        %1302 = vmatpush1.bf16.msra.mxu0 %v1164
        %1303 = vmatprep.subr.bf16.mxu0 %v1167
        %1304 = vmatpush1.bf16.msra.mxu0 %v1166
        %1305 = vmatprep.subr.bf16.mxu0 %v1169
        %1306 = vmatpush1.bf16.msra.mxu0 %v1168
        %1307 = vmatprep.subr.bf16.mxu0 %v1171
        %1308 = vmatpush1.bf16.msra.mxu0 %v1170
        %1309 = vmatprep.subr.bf16.mxu0 %v1173
        %1310 = vmatpush1.bf16.msra.mxu0 %v1172
        %1311 = vmatprep.mubr.bf16.mxu0 %v853
        %1312 = vmatmul.mubr.bf16.gmra.mrb[0].mxu0 %v852
        %v1313 = vpop.f32.mrb[0].mxu0
        %v1314 = vadd.f32 %v1273, %v1313
        %v1315 = vpop.f32.mrb[0].mxu0
        %v1316 = vadd.f32 %v1275, %v1315
        %v1317 = vpop.f32.mrb[0].mxu0
        %v1318 = vpop.f32.mrb[0].mxu0
        %1319 = vdwg.mxu0
        %v1320 = vadd.f32 %v354, %v1314
        %v1321 = vadd.f32 %v355, %v1316
        %v1322 = vld [vmem:[%s4] sm:$0x3]
        %v1324 = vlaneseq
        %v1325 = vshrl.u32 %v1324, 7
        %v1326 = vsub.s32 0, %v1325
        %v1327 = vrot.slane %v1322, %v1326
        %v1328 = vlaneseq
        %v1329 = vshrl.u32 %v1328, 7
        %v1330 = vsub.s32 1, %v1329
        %v1331 = vrot.slane %v1322, %v1330
        %v1334 = vadd.f32 %v1320, %v1327
        %v1335 = vadd.f32 %v1321, %v1331
        %v1336 = vpack.c.bf16 %v1334, %v1334
        %v1337 = vpack.c.bf16 %v1335, %v1335
        %v1338 = vld [vmem:[#allocation8] sm:$0xf]
        %v1339 = vld [vmem:[#allocation8 + $0x4] sm:$0xf]
        %v1340 = vld [vmem:[#allocation8 + $0x8] sm:$0xf]
        %v1341 = vld [vmem:[#allocation8 + $0xc] sm:$0xf]
        %v1342 = vld [vmem:[#allocation8 + $0x10] sm:$0xf]
        %v1343 = vld [vmem:[#allocation8 + $0x14] sm:$0xf]
        %v1344 = vld [vmem:[#allocation8 + $0x18] sm:$0xf]
        %v1345 = vld [vmem:[#allocation8 + $0x1c] sm:$0xf]
        %v1346 = vld [vmem:[#allocation8 + $0x20] sm:$0xf]
        %v1347 = vld [vmem:[#allocation8 + $0x24] sm:$0xf]
        %v1348 = vld [vmem:[#allocation8 + $0x28] sm:$0xf]
        %v1349 = vld [vmem:[#allocation8 + $0x2c] sm:$0xf]
        %v1350 = vld [vmem:[#allocation8 + $0x30] sm:$0xf]
        %v1351 = vld [vmem:[#allocation8 + $0x34] sm:$0xf]
        %v1352 = vld [vmem:[#allocation8 + $0x38] sm:$0xf]
        %v1353 = vld [vmem:[#allocation8 + $0x3c] sm:$0xf]
        %v1354 = vld [vmem:[#allocation8 + $0x40] sm:$0xf]
        %v1355 = vld [vmem:[#allocation8 + $0x44] sm:$0xf]
        %v1356 = vld [vmem:[#allocation8 + $0x48] sm:$0xf]
        %v1357 = vld [vmem:[#allocation8 + $0x4c] sm:$0xf]
        %v1358 = vld [vmem:[#allocation8 + $0x50] sm:$0xf]
        %v1359 = vld [vmem:[#allocation8 + $0x54] sm:$0xf]
        %v1360 = vld [vmem:[#allocation8 + $0x58] sm:$0xf]
        %v1361 = vld [vmem:[#allocation8 + $0x5c] sm:$0xf]
        %v1362 = vld [vmem:[#allocation8 + $0x60] sm:$0xf]
        %v1363 = vld [vmem:[#allocation8 + $0x64] sm:$0xf]
        %v1364 = vld [vmem:[#allocation8 + $0x68] sm:$0xf]
        %v1365 = vld [vmem:[#allocation8 + $0x6c] sm:$0xf]
        %v1366 = vld [vmem:[#allocation8 + $0x70] sm:$0xf]
        %v1367 = vld [vmem:[#allocation8 + $0x74] sm:$0xf]
        %v1368 = vld [vmem:[#allocation8 + $0x78] sm:$0xf]
        %v1369 = vld [vmem:[#allocation8 + $0x7c] sm:$0xf]
        %v1402 = vunpack.c.l.b16 %v1338
        %v1403 = vunpack.c.l.b16 %v1339
        %v1404 = vunpack.c.l.b16 %v1340
        %v1405 = vunpack.c.l.b16 %v1341
        %v1406 = vunpack.c.l.b16 %v1342
        %v1407 = vunpack.c.l.b16 %v1343
        %v1408 = vunpack.c.l.b16 %v1344
        %v1409 = vunpack.c.l.b16 %v1345
        %v1410 = vunpack.c.l.b16 %v1346
        %v1411 = vunpack.c.l.b16 %v1347
        %v1412 = vunpack.c.l.b16 %v1348
        %v1413 = vunpack.c.l.b16 %v1349
        %v1414 = vunpack.c.l.b16 %v1350
        %v1415 = vunpack.c.l.b16 %v1351
        %v1416 = vunpack.c.l.b16 %v1352
        %v1417 = vunpack.c.l.b16 %v1353
        %v1418 = vunpack.c.l.b16 %v1354
        %v1419 = vunpack.c.l.b16 %v1355
        %v1420 = vunpack.c.l.b16 %v1356
        %v1421 = vunpack.c.l.b16 %v1357
        %v1422 = vunpack.c.l.b16 %v1358
        %v1423 = vunpack.c.l.b16 %v1359
        %v1424 = vunpack.c.l.b16 %v1360
        %v1425 = vunpack.c.l.b16 %v1361
        %v1426 = vunpack.c.l.b16 %v1362
        %v1427 = vunpack.c.l.b16 %v1363
        %v1428 = vunpack.c.l.b16 %v1364
        %v1429 = vunpack.c.l.b16 %v1365
        %v1430 = vunpack.c.l.b16 %v1366
        %v1431 = vunpack.c.l.b16 %v1367
        %v1432 = vunpack.c.l.b16 %v1368
        %v1433 = vunpack.c.l.b16 %v1369
        %v1434 = vpack.c.b16 %v1403, %v1402
        %v1435 = vpack.c.b16 %v1405, %v1404
        %v1436 = vpack.c.b16 %v1407, %v1406
        %v1437 = vpack.c.b16 %v1409, %v1408
        %v1438 = vpack.c.b16 %v1411, %v1410
        %v1439 = vpack.c.b16 %v1413, %v1412
        %v1440 = vpack.c.b16 %v1415, %v1414
        %v1441 = vpack.c.b16 %v1417, %v1416
        %v1442 = vpack.c.b16 %v1419, %v1418
        %v1443 = vpack.c.b16 %v1421, %v1420
        %v1444 = vpack.c.b16 %v1423, %v1422
        %v1445 = vpack.c.b16 %v1425, %v1424
        %v1446 = vpack.c.b16 %v1427, %v1426
        %v1447 = vpack.c.b16 %v1429, %v1428
        %v1448 = vpack.c.b16 %v1431, %v1430
        %v1449 = vpack.c.b16 %v1433, %v1432
        %1466 = vmatprep.subr.bf16.mxu0 0
        %1467 = vmatpush1.bf16.msra.mxu0 %v1434
        %1468 = vmatprep.subr.bf16.mxu0 0
        %1469 = vmatpush1.bf16.msra.mxu0 %v1435
        %1470 = vmatprep.subr.bf16.mxu0 0
        %1471 = vmatpush1.bf16.msra.mxu0 %v1436
        %1472 = vmatprep.subr.bf16.mxu0 0
        %1473 = vmatpush1.bf16.msra.mxu0 %v1437
        %1474 = vmatprep.subr.bf16.mxu0 0
        %1475 = vmatpush1.bf16.msra.mxu0 %v1438
        %1476 = vmatprep.subr.bf16.mxu0 0
        %1477 = vmatpush1.bf16.msra.mxu0 %v1439
        %1478 = vmatprep.subr.bf16.mxu0 0
        %1479 = vmatpush1.bf16.msra.mxu0 %v1440
        %1480 = vmatprep.subr.bf16.mxu0 0
        %1481 = vmatpush1.bf16.msra.mxu0 %v1441
        %1482 = vmatprep.subr.bf16.mxu0 0
        %1483 = vmatpush1.bf16.msra.mxu0 %v1442
        %1484 = vmatprep.subr.bf16.mxu0 0
        %1485 = vmatpush1.bf16.msra.mxu0 %v1443
        %1486 = vmatprep.subr.bf16.mxu0 0
        %1487 = vmatpush1.bf16.msra.mxu0 %v1444
        %1488 = vmatprep.subr.bf16.mxu0 0
        %1489 = vmatpush1.bf16.msra.mxu0 %v1445
        %1490 = vmatprep.subr.bf16.mxu0 0
        %1491 = vmatpush1.bf16.msra.mxu0 %v1446
        %1492 = vmatprep.subr.bf16.mxu0 0
        %1493 = vmatpush1.bf16.msra.mxu0 %v1447
        %1494 = vmatprep.subr.bf16.mxu0 0
        %1495 = vmatpush1.bf16.msra.mxu0 %v1448
        %1496 = vmatprep.subr.bf16.mxu0 0
        %1497 = vmatpush1.bf16.msra.mxu0 %v1449
        %1498 = vmatprep.mubr.bf16.mxu0 %v1337
        %1499 = vmatmul.mubr.bf16.gmra.mrb[0].mxu0 %v1336
        %v1500 = vpop.f32.mrb[0].mxu0
        %v1501 = vadd.f32 0.0, %v1500
        %v1502 = vpop.f32.mrb[0].mxu0
        %v1503 = vpop.f32.mrb[0].mxu0
        %v1504 = vpop.f32.mrb[0].mxu0
        %1505 = vdwg.mxu0
        %v1506 = vlaneseq
        %v1507 = vand.u32 %v1506, 127
        %vm1508 = vcmp.ge.s32.totalorder %v1507, 0
        %vm1509 = vcmp.lt.s32.totalorder %v1507, 16
        %vm1510 = vmand %vm1508, %vm1509
        %v1511 = vsel %vm1510, %v1501, -inf
        %1512 = vmax.xlane.f32.xlu0 %v1511
        %v1513 = vpop.xlane.xlu0 %1512
        %vm1514 = vcmp.eq.f32.partialorder %v1511, %v1513
        %v1515 = vsel %vm1514, %v1507, 128
        %v1516 = vand.u32 %v1515, 65535
        %v1517 = vshra.s32 %v1515, 16
        %v1518 = vcvt.s32.f32 %v1516
        %v1519 = vcvt.s32.f32 %v1517
        %1520 = vmin.xlane.f32.xlu0 %v1519
        %v1521 = vpop.xlane.xlu0 %1520
        %vm1522 = vcmp.eq.f32.partialorder %v1519, %v1521
        %v1523 = vsel %vm1522, %v1518, inf
        %1524 = vmin.xlane.f32.xlu0 %v1523
        %v1525 = vpop.xlane.xlu0 %1524
        %v1526 = vcvt.f32.s32 %v1525
        %v1527 = vcvt.f32.s32 %v1521
        %v1528 = vshll.u32 %v1527, 16
        %v1529 = vadd.s32 %v1528, %v1526
        %vm1530 = vcmp.eq.s32.totalorder %v1507, %v1529
        %v1531 = vsel %vm1530, 1, 0
        %v1532 = vcvt.s32.f32 %v1531
        %v1533 = vadd.f32 %v1532, 0.0
        %vm1534 = vcmp.ge.s32.totalorder %v1507, 16
        %vm1535 = vcmp.lt.s32.totalorder %v1507, 32
        %vm1536 = vmand %vm1534, %vm1535
        %v1537 = vsel %vm1536, %v1501, -inf
        %1538 = vmax.xlane.f32.xlu0 %v1537
        %v1539 = vpop.xlane.xlu0 %1538
        %vm1540 = vcmp.eq.f32.partialorder %v1537, %v1539
        %v1541 = vsel %vm1540, %v1507, 128
        %v1542 = vand.u32 %v1541, 65535
        %v1543 = vshra.s32 %v1541, 16
        %v1544 = vcvt.s32.f32 %v1542
        %v1545 = vcvt.s32.f32 %v1543
        %1546 = vmin.xlane.f32.xlu0 %v1545
        %v1547 = vpop.xlane.xlu0 %1546
        %vm1548 = vcmp.eq.f32.partialorder %v1545, %v1547
        %v1549 = vsel %vm1548, %v1544, inf
        %1550 = vmin.xlane.f32.xlu0 %v1549
        %v1551 = vpop.xlane.xlu0 %1550
        %v1552 = vcvt.f32.s32 %v1551
        %v1553 = vcvt.f32.s32 %v1547
        %v1554 = vshll.u32 %v1553, 16
        %v1555 = vadd.s32 %v1554, %v1552
        %vm1556 = vcmp.eq.s32.totalorder %v1507, %v1555
        %v1557 = vsel %vm1556, 1, 0
        %v1558 = vcvt.s32.f32 %v1557
        %v1559 = vadd.f32 %v1533, %v1558
        %vm1560 = vcmp.ge.s32.totalorder %v1507, 32
        %vm1561 = vcmp.lt.s32.totalorder %v1507, 48
        %vm1562 = vmand %vm1560, %vm1561
        %v1563 = vsel %vm1562, %v1501, -inf
        %1564 = vmax.xlane.f32.xlu0 %v1563
        %v1565 = vpop.xlane.xlu0 %1564
        %vm1566 = vcmp.eq.f32.partialorder %v1563, %v1565
        %v1567 = vsel %vm1566, %v1507, 128
        %v1568 = vand.u32 %v1567, 65535
        %v1569 = vshra.s32 %v1567, 16
        %v1570 = vcvt.s32.f32 %v1568
        %v1571 = vcvt.s32.f32 %v1569
        %1572 = vmin.xlane.f32.xlu0 %v1571
        %v1573 = vpop.xlane.xlu0 %1572
        %vm1574 = vcmp.eq.f32.partialorder %v1571, %v1573
        %v1575 = vsel %vm1574, %v1570, inf
        %1576 = vmin.xlane.f32.xlu0 %v1575
        %v1577 = vpop.xlane.xlu0 %1576
        %v1578 = vcvt.f32.s32 %v1577
        %v1579 = vcvt.f32.s32 %v1573
        %v1580 = vshll.u32 %v1579, 16
        %v1581 = vadd.s32 %v1580, %v1578
        %vm1582 = vcmp.eq.s32.totalorder %v1507, %v1581
        %v1583 = vsel %vm1582, 1, 0
        %v1584 = vcvt.s32.f32 %v1583
        %v1585 = vadd.f32 %v1559, %v1584
        %vm1586 = vcmp.ge.s32.totalorder %v1507, 48
        %vm1587 = vcmp.lt.s32.totalorder %v1507, 64
        %vm1588 = vmand %vm1586, %vm1587
        %v1589 = vsel %vm1588, %v1501, -inf
        %1590 = vmax.xlane.f32.xlu0 %v1589
        %v1591 = vpop.xlane.xlu0 %1590
        %vm1592 = vcmp.eq.f32.partialorder %v1589, %v1591
        %v1593 = vsel %vm1592, %v1507, 128
        %v1594 = vand.u32 %v1593, 65535
        %v1595 = vshra.s32 %v1593, 16
        %v1596 = vcvt.s32.f32 %v1594
        %v1597 = vcvt.s32.f32 %v1595
        %1598 = vmin.xlane.f32.xlu0 %v1597
        %v1599 = vpop.xlane.xlu0 %1598
        %vm1600 = vcmp.eq.f32.partialorder %v1597, %v1599
        %v1601 = vsel %vm1600, %v1596, inf
        %1602 = vmin.xlane.f32.xlu0 %v1601
        %v1603 = vpop.xlane.xlu0 %1602
        %v1604 = vcvt.f32.s32 %v1603
        %v1605 = vcvt.f32.s32 %v1599
        %v1606 = vshll.u32 %v1605, 16
        %v1607 = vadd.s32 %v1606, %v1604
        %vm1608 = vcmp.eq.s32.totalorder %v1507, %v1607
        %v1609 = vsel %vm1608, 1, 0
        %v1610 = vcvt.s32.f32 %v1609
        %v1611 = vadd.f32 %v1585, %v1610
        %vm1612 = vcmp.ge.s32.totalorder %v1507, 64
        %vm1613 = vcmp.lt.s32.totalorder %v1507, 80
        %vm1614 = vmand %vm1612, %vm1613
        %v1615 = vsel %vm1614, %v1501, -inf
        %1616 = vmax.xlane.f32.xlu0 %v1615
        %v1617 = vpop.xlane.xlu0 %1616
        %vm1618 = vcmp.eq.f32.partialorder %v1615, %v1617
        %v1619 = vsel %vm1618, %v1507, 128
        %v1620 = vand.u32 %v1619, 65535
        %v1621 = vshra.s32 %v1619, 16
        %v1622 = vcvt.s32.f32 %v1620
        %v1623 = vcvt.s32.f32 %v1621
        %1624 = vmin.xlane.f32.xlu0 %v1623
        %v1625 = vpop.xlane.xlu0 %1624
        %vm1626 = vcmp.eq.f32.partialorder %v1623, %v1625
        %v1627 = vsel %vm1626, %v1622, inf
        %1628 = vmin.xlane.f32.xlu0 %v1627
        %v1629 = vpop.xlane.xlu0 %1628
        %v1630 = vcvt.f32.s32 %v1629
        %v1631 = vcvt.f32.s32 %v1625
        %v1632 = vshll.u32 %v1631, 16
        %v1633 = vadd.s32 %v1632, %v1630
        %vm1634 = vcmp.eq.s32.totalorder %v1507, %v1633
        %v1635 = vsel %vm1634, 1, 0
        %v1636 = vcvt.s32.f32 %v1635
        %v1637 = vadd.f32 %v1611, %v1636
        %vm1638 = vcmp.ge.s32.totalorder %v1507, 80
        %vm1639 = vcmp.lt.s32.totalorder %v1507, 96
        %vm1640 = vmand %vm1638, %vm1639
        %v1641 = vsel %vm1640, %v1501, -inf
        %1642 = vmax.xlane.f32.xlu0 %v1641
        %v1643 = vpop.xlane.xlu0 %1642
        %vm1644 = vcmp.eq.f32.partialorder %v1641, %v1643
        %v1645 = vsel %vm1644, %v1507, 128
        %v1646 = vand.u32 %v1645, 65535
        %v1647 = vshra.s32 %v1645, 16
        %v1648 = vcvt.s32.f32 %v1646
        %v1649 = vcvt.s32.f32 %v1647
        %1650 = vmin.xlane.f32.xlu0 %v1649
        %v1651 = vpop.xlane.xlu0 %1650
        %vm1652 = vcmp.eq.f32.partialorder %v1649, %v1651
        %v1653 = vsel %vm1652, %v1648, inf
        %1654 = vmin.xlane.f32.xlu0 %v1653
        %v1655 = vpop.xlane.xlu0 %1654
        %v1656 = vcvt.f32.s32 %v1655
        %v1657 = vcvt.f32.s32 %v1651
        %v1658 = vshll.u32 %v1657, 16
        %v1659 = vadd.s32 %v1658, %v1656
        %vm1660 = vcmp.eq.s32.totalorder %v1507, %v1659
        %v1661 = vsel %vm1660, 1, 0
        %v1662 = vcvt.s32.f32 %v1661
        %v1663 = vadd.f32 %v1637, %v1662
        %vm1664 = vcmp.ge.s32.totalorder %v1507, 96
        %vm1665 = vcmp.lt.s32.totalorder %v1507, 112
        %vm1666 = vmand %vm1664, %vm1665
        %v1667 = vsel %vm1666, %v1501, -inf
        %1668 = vmax.xlane.f32.xlu0 %v1667
        %v1669 = vpop.xlane.xlu0 %1668
        %vm1670 = vcmp.eq.f32.partialorder %v1667, %v1669
        %v1671 = vsel %vm1670, %v1507, 128
        %v1672 = vand.u32 %v1671, 65535
        %v1673 = vshra.s32 %v1671, 16
        %v1674 = vcvt.s32.f32 %v1672
        %v1675 = vcvt.s32.f32 %v1673
        %1676 = vmin.xlane.f32.xlu0 %v1675
        %v1677 = vpop.xlane.xlu0 %1676
        %vm1678 = vcmp.eq.f32.partialorder %v1675, %v1677
        %v1679 = vsel %vm1678, %v1674, inf
        %1680 = vmin.xlane.f32.xlu0 %v1679
        %v1681 = vpop.xlane.xlu0 %1680
        %v1682 = vcvt.f32.s32 %v1681
        %v1683 = vcvt.f32.s32 %v1677
        %v1684 = vshll.u32 %v1683, 16
        %v1685 = vadd.s32 %v1684, %v1682
        %vm1686 = vcmp.eq.s32.totalorder %v1507, %v1685
        %v1687 = vsel %vm1686, 1, 0
        %v1688 = vcvt.s32.f32 %v1687
        %v1689 = vadd.f32 %v1663, %v1688
        %vm1690 = vcmp.ge.s32.totalorder %v1507, 112
        %vm1691 = vcmp.lt.s32.totalorder %v1507, 128
        %vm1692 = vmand %vm1690, %vm1691
        %v1693 = vsel %vm1692, %v1501, -inf
        %1694 = vmax.xlane.f32.xlu0 %v1693
        %v1695 = vpop.xlane.xlu0 %1694
        %vm1696 = vcmp.eq.f32.partialorder %v1693, %v1695
        %v1697 = vsel %vm1696, %v1507, 128
        %v1698 = vand.u32 %v1697, 65535
        %v1699 = vshra.s32 %v1697, 16
        %v1700 = vcvt.s32.f32 %v1698
        %v1701 = vcvt.s32.f32 %v1699
        %1702 = vmin.xlane.f32.xlu0 %v1701
        %v1703 = vpop.xlane.xlu0 %1702
        %vm1704 = vcmp.eq.f32.partialorder %v1701, %v1703
        %v1705 = vsel %vm1704, %v1700, inf
        %1706 = vmin.xlane.f32.xlu0 %v1705
        %v1707 = vpop.xlane.xlu0 %1706
        %v1708 = vcvt.f32.s32 %v1707
        %v1709 = vcvt.f32.s32 %v1703
        %v1710 = vshll.u32 %v1709, 16
        %v1711 = vadd.s32 %v1710, %v1708
        %vm1712 = vcmp.eq.s32.totalorder %v1507, %v1711
        %v1713 = vsel %vm1712, 1, 0
        %v1714 = vcvt.s32.f32 %v1713
        %v1715 = vadd.f32 %v1689, %v1714
        %v1716 = vld [vmem:[#allocation10] sm:$0xff]
        %v1717 = vld [vmem:[#allocation10 + $0x8] sm:$0xff]
        %v1718 = vld [vmem:[#allocation10 + $0x10] sm:$0xff]
        %v1719 = vld [vmem:[#allocation10 + $0x18] sm:$0xff]
        %v1720 = vld [vmem:[#allocation10 + $0x20] sm:$0xff]
        %v1721 = vld [vmem:[#allocation10 + $0x28] sm:$0xff]
        %v1722 = vld [vmem:[#allocation10 + $0x30] sm:$0xff]
        %v1723 = vld [vmem:[#allocation10 + $0x38] sm:$0xff]
        %v1724 = vld [vmem:[#allocation10 + $0x40] sm:$0xff]
        %v1725 = vld [vmem:[#allocation10 + $0x48] sm:$0xff]
        %v1726 = vld [vmem:[#allocation10 + $0x50] sm:$0xff]
        %v1727 = vld [vmem:[#allocation10 + $0x58] sm:$0xff]
        %v1728 = vld [vmem:[#allocation10 + $0x60] sm:$0xff]
        %v1729 = vld [vmem:[#allocation10 + $0x68] sm:$0xff]
        %v1730 = vld [vmem:[#allocation10 + $0x70] sm:$0xff]
        %v1731 = vld [vmem:[#allocation10 + $0x78] sm:$0xff]
        %v1732 = vld [vmem:[#allocation10 + $0x80] sm:$0xff]
        %v1733 = vld [vmem:[#allocation10 + $0x88] sm:$0xff]
        %v1734 = vld [vmem:[#allocation10 + $0x90] sm:$0xff]
        %v1735 = vld [vmem:[#allocation10 + $0x98] sm:$0xff]
        %v1736 = vld [vmem:[#allocation10 + $0xa0] sm:$0xff]
        %v1737 = vld [vmem:[#allocation10 + $0xa8] sm:$0xff]
        %v1738 = vld [vmem:[#allocation10 + $0xb0] sm:$0xff]
        %v1739 = vld [vmem:[#allocation10 + $0xb8] sm:$0xff]
        %v1740 = vld [vmem:[#allocation10 + $0xc0] sm:$0xff]
        %v1741 = vld [vmem:[#allocation10 + $0xc8] sm:$0xff]
        %v1742 = vld [vmem:[#allocation10 + $0xd0] sm:$0xff]
        %v1743 = vld [vmem:[#allocation10 + $0xd8] sm:$0xff]
        %v1744 = vld [vmem:[#allocation10 + $0xe0] sm:$0xff]
        %v1745 = vld [vmem:[#allocation10 + $0xe8] sm:$0xff]
        %v1746 = vld [vmem:[#allocation10 + $0xf0] sm:$0xff]
        %v1747 = vld [vmem:[#allocation10 + $0xf8] sm:$0xff]
        %1748 = vmatprep.subr.mxu0 %v1717
        %1749 = vmatpush1.msra.mxu0 %v1716
        %1750 = vmatprep.subr.mxu0 %v1719
        %1751 = vmatpush1.msra.mxu0 %v1718
        %1752 = vmatprep.subr.mxu0 %v1721
        %1753 = vmatpush1.msra.mxu0 %v1720
        %1754 = vmatprep.subr.mxu0 %v1723
        %1755 = vmatpush1.msra.mxu0 %v1722
        %1756 = vmatprep.subr.mxu0 %v1725
        %1757 = vmatpush1.msra.mxu0 %v1724
        %1758 = vmatprep.subr.mxu0 %v1727
        %1759 = vmatpush1.msra.mxu0 %v1726
        %1760 = vmatprep.subr.mxu0 %v1729
        %1761 = vmatpush1.msra.mxu0 %v1728
        %1762 = vmatprep.subr.mxu0 %v1731
        %1763 = vmatpush1.msra.mxu0 %v1730
        %1764 = vmatprep.subr.mxu0 %v1733
        %1765 = vmatpush1.msra.mxu0 %v1732
        %1766 = vmatprep.subr.mxu0 %v1735
        %1767 = vmatpush1.msra.mxu0 %v1734
        %1768 = vmatprep.subr.mxu0 %v1737
        %1769 = vmatpush1.msra.mxu0 %v1736
        %1770 = vmatprep.subr.mxu0 %v1739
        %1771 = vmatpush1.msra.mxu0 %v1738
        %1772 = vmatprep.subr.mxu0 %v1741
        %1773 = vmatpush1.msra.mxu0 %v1740
        %1774 = vmatprep.subr.mxu0 %v1743
        %1775 = vmatpush1.msra.mxu0 %v1742
        %1776 = vmatprep.subr.mxu0 %v1745
        %1777 = vmatpush1.msra.mxu0 %v1744
        %1778 = vmatprep.subr.mxu0 %v1747
        %1779 = vmatpush1.msra.mxu0 %v1746
        %1780 = vmatprep.subr.mxu0 0.0
        %1781 = vmatpush1.msra.mxu0 0.0
        %1782 = vmatprep.subr.mxu0 0.0
        %1783 = vmatpush1.msra.mxu0 0.0
        %1784 = vmatprep.subr.mxu0 0.0
        %1785 = vmatpush1.msra.mxu0 0.0
        %1786 = vmatprep.subr.mxu0 0.0
        %1787 = vmatpush1.msra.mxu0 0.0
        %1788 = vmatprep.subr.mxu0 0.0
        %1789 = vmatpush1.msra.mxu0 0.0
        %1790 = vmatprep.subr.mxu0 0.0
        %1791 = vmatpush1.msra.mxu0 0.0
        %1792 = vmatprep.subr.mxu0 0.0
        %1793 = vmatpush1.msra.mxu0 0.0
        %1794 = vmatprep.subr.mxu0 0.0
        %1795 = vmatpush1.msra.mxu0 0.0
        %1796 = vmatprep.subr.mxu0 0.0
        %1797 = vmatpush1.msra.mxu0 0.0
        %1798 = vmatprep.subr.mxu0 0.0
        %1799 = vmatpush1.msra.mxu0 0.0
        %1800 = vmatprep.subr.mxu0 0.0
        %1801 = vmatpush1.msra.mxu0 0.0
        %1802 = vmatprep.subr.mxu0 0.0
        %1803 = vmatpush1.msra.mxu0 0.0
        %1804 = vmatprep.subr.mxu0 0.0
        %1805 = vmatpush1.msra.mxu0 0.0
        %1806 = vmatprep.subr.mxu0 0.0
        %1807 = vmatpush1.msra.mxu0 0.0
        %1808 = vmatprep.subr.mxu0 0.0
        %1809 = vmatpush1.msra.mxu0 0.0
        %1810 = vmatprep.subr.mxu0 0.0
        %1811 = vmatpush1.msra.mxu0 0.0
        %1812 = vmatprep.mubr.f32.mxu0 0.0
        %1813 = vmatmul.mubr.f32.gmra.mrb[0].mxu0 %v1715
        %v1814 = vpop.f32.mrb[0].mxu0
        %v1815 = vadd.f32 0.0, %v1814
        %v1816 = vpop.f32.mrb[0].mxu0
        %v1817 = vadd.f32 0.0, %v1816
        %1818 = vdwg.mxu0
        %1819 = vst [vmem:[%s352] sm:$0xff] %v1815
        %1820 = vst [vmem:[%s352 + $0x8] sm:$0xff] %v1817
        %s1821 = sand.u32 %s186, 1
        %s1822 = scalar_lea.sflag [#allocation4], %s1821
        %s1823 = sand.u32 %s186, 1
        %s1824 = smul.addr %s1823, 16
        %s1825 = scalar_lea.vmem [#allocation11], %s1824
        // Predicated region
        $region69: #{tpu_custom_call.1} parent=47 // pred_check
          %p1826 = pneg %p196
        $region70: #{tpu_custom_call.1} parent=47 // pred_check_branch
          %1828 = sbr.rel (%p1826) target = $region72
        $region71: #{tpu_custom_call.1} parent=47 // pred_region
          %s1830 = ssub.s32 256, 256
          %1831 = vsyncadd %s1822, %s1830
          %s1832 = smul.addr %s26, 2
          %s1833 = smul.addr %s1832, 128
          %s1834 = scalar_lea.hbm %s7, %s1833
          %s1836 = sshll.u32 %s1825, 4
          %s1837 = int_to_ptr.vmem [resolvable:$true] %s1836
          %1839 = dma.vmem_to_hbm [thread:$0]  %s1837, 256, %s1834, %s1822
        $region72: #{tpu_custom_call.1} parent=47 // pred_fallthru
          _
      $region48: #{tpu_custom_call.1} parent=5 // pred_fallthru
        _
      %p1840 = scmp.le.s32.totalorder 2, %s21
      // Predicated region
      $region73: #{tpu_custom_call.1} parent=5 // pred_check
        %p1841 = pneg %p1840
      $region74: #{tpu_custom_call.1} parent=5 // pred_check_branch
        %1843 = sbr.rel (%p1841) target = $region76
      $region75: #{tpu_custom_call.1} parent=5 // pred_region
        %s1844 = ssub.s32 %s21, 2
        // Predicated region
        $region77: #{tpu_custom_call.1} parent=75 // pred_check
          %p1845 = pneg %p202
        $region78: #{tpu_custom_call.1} parent=75 // pred_check_branch
          %1847 = sbr.rel (%p1845) target = $region80
        $region79: #{tpu_custom_call.1} parent=75 // pred_region
          %s1848 = sand.u32 %s187, 1
          %s1849 = scalar_lea.sflag [#allocation4], %s1848
          %s1850 = sand.u32 %s187, 1
          %s1851 = smul.addr %s1850, 16
          %s1852 = scalar_lea.vmem [#allocation11], %s1851
          %1853 = dma.done %s1849, 256
        $region80: #{tpu_custom_call.1} parent=75 // pred_fallthru
          _
      $region76: #{tpu_custom_call.1} parent=5 // pred_fallthru
        _
    $region6: #{tpu_custom_call.1} parent=1 // loop_footer
      %s25 = sadd.s32 1, %s21
    $region7: #{tpu_custom_call.1} parent=1 // loop_footer_branch
      %20 = sbr.rel target = $region3
    $region8: #{tpu_custom_call.1} parent=1 // loop_exit
      _
    %1854 = vsyncpa [#allocation3], 1
    %s1855 = scalar_lea.sflag [#allocation3], 1
    %1856 = vsyncpa %s1855, 1
    %1857 = vsyncpa [#allocation6], 1
    %1858 = vsyncpa [#allocation9], 1
    %1859 = vsyncpa [#allocation4], 1
    %s1860 = scalar_lea.sflag [#allocation4], 1
    %1861 = vsyncpa %s1860, 1

</llo_original>
